<compile_context>
chip_gen: v6e
topology: v6e:2x2x1
jax: 0.10.0
libtpu: 0.0.40
codegen_flags: <defaults>
</compile_context>

<pallas_src>
import functools

import jax
import jax.numpy as jnp
from jax.experimental import pallas as pl
from jax.experimental.pallas import tpu as pltpu

BN_EPS = 1e-5


def _conv_stats_kernel(H, W, K, pad, x_ref, w_ref, y_ref, stats_ref):
    """Pass 1: 'same' conv (stride 1, no bias) + per-sample channel sums.

    x_ref:     (1, Cin, M + H*W + M)  zero-extended flat spatial, M = pad*(W+1)
    w_ref:     (K*K, Cout, Cin)       conv weights, tap-major
    y_ref:     (1, Cout, H*W)         conv output
    stats_ref: (1, Cout, 2)           per-sample [sum, sum_of_squares] per channel
    """
    HW = H * W
    M = pad * (W + 1)
    Cout = y_ref.shape[1]

    # Column index of every flattened output position (hoisted out of tap loop).
    hw = jax.lax.broadcasted_iota(jnp.int32, (1, HW), 1)
    col = hw % W

    acc = jnp.zeros((Cout, HW), jnp.float32)
    for kh in range(K):
        for kw in range(K):
            dh, dw = kh - pad, kw - pad
            start = M + dh * W + dw
            # Shifted window re-read from VMEM per tap; rows that fall outside
            # the image land in the zero extension of the flat layout.
            window = x_ref[0, :, start:start + HW]               # (Cin, HW)
            if dw != 0:
                # Kill row-wraparound columns of the flattened shift.
                valid = (col + dw >= 0) & (col + dw < W)         # (1, HW)
                window = jnp.where(valid, window, 0.0)
            acc = acc + jnp.dot(w_ref[kh * K + kw], window,
                                preferred_element_type=jnp.float32)

    y_ref[0] = acc.astype(y_ref.dtype)
    # Per-sample channel statistics for the (training-mode) BatchNorm.
    stats_ref[0, :, 0:1] = jnp.sum(acc, axis=-1, keepdims=True)
    stats_ref[0, :, 1:2] = jnp.sum(acc * acc, axis=-1, keepdims=True)


def _bn_scale_kernel(inv_count, eps, y_ref, stats_ref, gamma_ref, beta_ref, o_ref):
    """Pass 2: BatchNorm2d rescale using batch statistics.

    y_ref/o_ref: (1, Cout, HW_TILE); stats_ref: (B, Cout, 2);
    gamma_ref/beta_ref: (Cout, 1).
    """
    tot = jnp.sum(stats_ref[...], axis=0)                  # (Cout, 2)
    mean = tot[:, 0:1] * inv_count                         # (Cout, 1)
    var = tot[:, 1:2] * inv_count - mean * mean            # biased batch variance
    scale = gamma_ref[...] * jax.lax.rsqrt(var + eps)      # rsqrt -> EUP slot
    shift = beta_ref[...] - mean * scale
    # Single lane-broadcast of the (Cout, 1) scale/shift -> pure VPU multiply-add.
    o_ref[0] = (y_ref[0] * scale + shift).astype(o_ref.dtype)


def _pick_hw_tile(HW, C, bytes_budget=4 << 20):
    """Largest multiple-of-128 spatial tile dividing HW such that one (C, tile)
    f32 block stays under `bytes_budget` (Pallas double-buffers each side; keep
    well under v7x's 32 MiB default scoped VMEM / 64 MiB physical)."""
    if HW % 128 != 0:
        return HW
    tile = min(HW, max(128, (bytes_budget // (4 * C * 128)) * 128))
    while HW % tile != 0:
        tile -= 128
    return tile


@jax.jit
def conv_block(x, w, gamma, beta):
    """out = BatchNorm2d(Conv2d(x, w, bias=False)) with batch statistics."""
    B, Cin, H, W = x.shape
    Cout, Cin_w, K, K2 = w.shape
    assert Cin_w == Cin and K == K2 and K % 2 == 1
    pad = K // 2                 # stride=1, "same" padding (see TODO above)
    HW = H * W
    M = pad * (W + 1)

    # Lane-dense layout: flatten spatial (last dim multiple of 128) and
    # zero-extend by M on both ends so every tap window is a plain static slice.
    x_ext = jnp.pad(x.reshape(B, Cin, HW), ((0, 0), (0, 0), (M, M)))
    w_taps = jnp.transpose(w.reshape(Cout, Cin, K * K), (2, 0, 1))   # (K*K, Cout, Cin)
    gamma2 = gamma.reshape(Cout, 1).astype(jnp.float32)
    beta2 = beta.reshape(Cout, 1).astype(jnp.float32)

    # ---- Pass 1: convolution + per-sample channel stats (grid over batch) ----
    y, stats = pl.pallas_call(
        functools.partial(_conv_stats_kernel, H, W, K, pad),
        grid=(B,),
        in_specs=[
            pl.BlockSpec((1, Cin, HW + 2 * M), lambda b: (b, 0, 0)),
            pl.BlockSpec((K * K, Cout, Cin), lambda b: (0, 0, 0)),
        ],
        out_specs=[
            pl.BlockSpec((1, Cout, HW), lambda b: (b, 0, 0)),
            pl.BlockSpec((1, Cout, 2), lambda b: (b, 0, 0)),
        ],
        out_shape=[
            jax.ShapeDtypeStruct((B, Cout, HW), x.dtype),
            jax.ShapeDtypeStruct((B, Cout, 2), jnp.float32),
        ],
        compiler_params=pltpu.CompilerParams(dimension_semantics=("parallel",)),
    )(x_ext, w_taps)

    # ---- Pass 2: BatchNorm rescale (grid over batch x spatial tiles) ----
    hw_tile = _pick_hw_tile(HW, Cout)
    inv_count = 1.0 / float(B * HW)
    out = pl.pallas_call(
        functools.partial(_bn_scale_kernel, inv_count, BN_EPS),
        grid=(B, HW // hw_tile),
        in_specs=[
            pl.BlockSpec((1, Cout, hw_tile), lambda b, t: (b, 0, t)),
            pl.BlockSpec((B, Cout, 2), lambda b, t: (0, 0, 0)),
            pl.BlockSpec((Cout, 1), lambda b, t: (0, 0)),
            pl.BlockSpec((Cout, 1), lambda b, t: (0, 0)),
        ],
        out_specs=pl.BlockSpec((1, Cout, hw_tile), lambda b, t: (b, 0, t)),
        out_shape=jax.ShapeDtypeStruct((B, Cout, HW), x.dtype),
        input_output_aliases={0: 0},   # y is dead after this call: reuse its HBM buffer
        compiler_params=pltpu.CompilerParams(
            dimension_semantics=("parallel", "parallel")),
    )(y, stats, gamma2, beta2)

    return out.reshape(B, Cout, H, W)


def conv_block_ref(x, w, gamma, beta, eps=BN_EPS):
    """Pure-JAX reference: Conv2d(bias=False) + training-mode BatchNorm2d."""
    pad_h, pad_w = w.shape[2] // 2, w.shape[3] // 2
    y = jax.lax.conv_general_dilated(
        x, w, window_strides=(1, 1),
        padding=((pad_h, pad_h), (pad_w, pad_w)),
        dimension_numbers=("NCHW", "OIHW", "NCHW"),
        precision=jax.lax.Precision.HIGHEST)
    mean = jnp.mean(y, axis=(0, 2, 3), keepdims=True)
    var = jnp.var(y, axis=(0, 2, 3), keepdims=True)        # biased, as in training BN
    g = gamma.reshape(1, -1, 1, 1)
    b = beta.reshape(1, -1, 1, 1)
    return g * (y - mean) * jax.lax.rsqrt(var + eps) + b


if __name__ == "__main__":
    # Small shapes consistent with the module: in_channels == out_channels = 4
    # (c1 treated as identity), kernel_size=3, stride=1, padding=1.
    B, C, H, W = 2, 4, 16, 16
    K = 3

    key = jax.random.PRNGKey(0)
    kx, kw, kg, kb = jax.random.split(key, 4)

    x = jax.random.normal(kx, (B, C, H, W), dtype=jnp.float32)
    lim = (C * K * K) ** -0.5
    w = jax.random.uniform(kw, (C, C, K, K), jnp.float32, -lim, lim)
    gamma = jax.random.uniform(kg, (C,), jnp.float32, 0.5, 1.5)
    beta = jax.random.uniform(kb, (C,), jnp.float32, -0.5, 0.5)

    out = conv_block(x, w, gamma, beta)
    out = jax.block_until_ready(out)

    ref = conv_block_ref(x, w, gamma, beta)
    assert out.shape == (B, C, H, W)
    max_err = float(jnp.max(jnp.abs(out - ref)))
    assert jnp.allclose(out, ref, atol=1e-4, rtol=1e-4), (
        f"mismatch vs reference (max abs err {max_err})")

    print("KERNEL_OK")
</pallas_src>

<mosaic_0001>
module attributes {stable_mosaic.version = 11 : i64} {
  func.func @_conv_stats_kernel(%arg0: i32, %arg1: memref<1x4x290xf32, #tpu.memory_space<vmem>>, %arg2: memref<9x4x4xf32, #tpu.memory_space<vmem>>, %arg3: memref<1x4x256xf32, #tpu.memory_space<vmem>>, %arg4: memref<1x4x2xf32, #tpu.memory_space<vmem>>) attributes {dimension_semantics = [#tpu.dimension_semantics<parallel>], iteration_bounds = array<i64: 2>, scalar_prefetch = 0 : i64, scratch_operands = 0 : i64, tpu.core_type = #tpu.core_type<tc>, window_params = [{transform_indices = @transform_0, window_bounds = array<i64: 1, 4, 290>}, {pipeline_mode = #tpu.pipeline_mode<synchronous>, transform_indices = @transform_1, window_bounds = array<i64: 9, 4, 4>}, {transform_indices = @transform_2, window_bounds = array<i64: 1, 4, 256>}, {transform_indices = @transform_3, window_bounds = array<i64: 1, 4, 2>}]} {
    %0 = tpu.iota {dimensions = array<i32: 1>} : vector<1x256xi32>
    %c16_i32 = arith.constant 16 : i32
    %c0_i32 = arith.constant 0 : i32
    %1 = arith.cmpi eq, %c16_i32, %c0_i32 : i32
    %c1_i32 = arith.constant 1 : i32
    %2 = arith.select %1, %c1_i32, %c16_i32 : i32
    %3 = vector.broadcast %2 : i32 to vector<1x256xi32>
    %4 = arith.remsi %0, %3 : vector<1x256xi32>
    %c0_i32_0 = arith.constant 0 : i32
    %5 = vector.broadcast %c0_i32_0 : i32 to vector<1x256xi32>
    %6 = arith.cmpi ne, %4, %5 : vector<1x256xi32>
    %c0_i32_1 = arith.constant 0 : i32
    %7 = vector.broadcast %c0_i32_1 : i32 to vector<1x256xi32>
    %8 = arith.cmpi slt, %4, %7 : vector<1x256xi32>
    %c0_i32_2 = arith.constant 0 : i32
    %9 = arith.cmpi slt, %2, %c0_i32_2 : i32
    %10 = vector.broadcast %9 : i1 to vector<1x256xi1>
    %11 = vector.broadcast %10 : vector<1x256xi1> to vector<1x256xi1>
    %12 = arith.xori %8, %11 : vector<1x256xi1>
    %13 = arith.andi %12, %6 : vector<1x256xi1>
    %14 = vector.broadcast %2 : i32 to vector<1x256xi32>
    %15 = arith.addi %4, %14 : vector<1x256xi32>
    %16 = arith.select %13, %15, %4 : vector<1x256xi1>, vector<1x256xi32>
    %cst = arith.constant 0.000000e+00 : f32
    %17 = vector.broadcast %cst : f32 to vector<4x256xf32>
    %c0 = arith.constant 0 : index
    %c0_3 = arith.constant 0 : index
    %c0_4 = arith.constant 0 : index
    %18 = vector.load %arg1[%c0, %c0_3, %c0_4] : memref<1x4x290xf32, #tpu.memory_space<vmem>>, vector<1x4x256xf32>
    %19 = vector.shape_cast %18 : vector<1x4x256xf32> to vector<4x256xf32>
    %c-1_i32 = arith.constant -1 : i32
    %20 = vector.broadcast %c-1_i32 : i32 to vector<1x256xi32>
    %21 = arith.addi %16, %20 : vector<1x256xi32>
    %c0_i32_5 = arith.constant 0 : i32
    %22 = vector.broadcast %c0_i32_5 : i32 to vector<1x256xi32>
    %23 = arith.cmpi sge, %21, %22 : vector<1x256xi32>
    %c-1_i32_6 = arith.constant -1 : i32
    %24 = vector.broadcast %c-1_i32_6 : i32 to vector<1x256xi32>
    %25 = arith.addi %16, %24 : vector<1x256xi32>
    %c16_i32_7 = arith.constant 16 : i32
    %26 = vector.broadcast %c16_i32_7 : i32 to vector<1x256xi32>
    %27 = arith.cmpi slt, %25, %26 : vector<1x256xi32>
    %28 = arith.andi %23, %27 : vector<1x256xi1>
    %cst_8 = arith.constant 0.000000e+00 : f32
    %29 = vector.shape_cast %28 : vector<1x256xi1> to vector<1x256xi1>
    %30 = vector.broadcast %29 : vector<1x256xi1> to vector<4x256xi1>
    %31 = vector.broadcast %cst_8 : f32 to vector<4x256xf32>
    %32 = arith.select %30, %19, %31 : vector<4x256xi1>, vector<4x256xf32>
    %c0_9 = arith.constant 0 : index
    %c0_10 = arith.constant 0 : index
    %c0_11 = arith.constant 0 : index
    %33 = vector.load %arg2[%c0_9, %c0_10, %c0_11] : memref<9x4x4xf32, #tpu.memory_space<vmem>>, vector<1x4x4xf32>
    %34 = vector.shape_cast %33 : vector<1x4x4xf32> to vector<4x4xf32>
    %cst_12 = arith.constant dense<0.000000e+00> : vector<4x256xf32>
    %35 = tpu.matmul %34, %32, %cst_12 {dimension_numbers = #tpu.dot_dimension_numbers<[1], [0], [0], [1], [0, 0, 1, 1], [], []>} : vector<4x4xf32>, vector<4x256xf32>, vector<4x256xf32> -> vector<4x256xf32>
    %36 = arith.addf %17, %35 : vector<4x256xf32>
    %c0_13 = arith.constant 0 : index
    %c0_14 = arith.constant 0 : index
    %c1 = arith.constant 1 : index
    %37 = vector.load %arg1[%c0_13, %c0_14, %c1] : memref<1x4x290xf32, #tpu.memory_space<vmem>>, vector<1x4x256xf32>
    %38 = vector.shape_cast %37 : vector<1x4x256xf32> to vector<4x256xf32>
    %c1_15 = arith.constant 1 : index
    %c0_16 = arith.constant 0 : index
    %c0_17 = arith.constant 0 : index
    %39 = vector.load %arg2[%c1_15, %c0_16, %c0_17] : memref<9x4x4xf32, #tpu.memory_space<vmem>>, vector<1x4x4xf32>
    %40 = vector.shape_cast %39 : vector<1x4x4xf32> to vector<4x4xf32>
    %cst_18 = arith.constant dense<0.000000e+00> : vector<4x256xf32>
    %41 = tpu.matmul %40, %38, %cst_18 {dimension_numbers = #tpu.dot_dimension_numbers<[1], [0], [0], [1], [0, 0, 1, 1], [], []>} : vector<4x4xf32>, vector<4x256xf32>, vector<4x256xf32> -> vector<4x256xf32>
    %42 = arith.addf %36, %41 : vector<4x256xf32>
    %c0_19 = arith.constant 0 : index
    %c0_20 = arith.constant 0 : index
    %c2 = arith.constant 2 : index
    %43 = vector.load %arg1[%c0_19, %c0_20, %c2] : memref<1x4x290xf32, #tpu.memory_space<vmem>>, vector<1x4x256xf32>
    %44 = vector.shape_cast %43 : vector<1x4x256xf32> to vector<4x256xf32>
    %c1_i32_21 = arith.constant 1 : i32
    %45 = vector.broadcast %c1_i32_21 : i32 to vector<1x256xi32>
    %46 = arith.addi %16, %45 : vector<1x256xi32>
    %c0_i32_22 = arith.constant 0 : i32
    %47 = vector.broadcast %c0_i32_22 : i32 to vector<1x256xi32>
    %48 = arith.cmpi sge, %46, %47 : vector<1x256xi32>
    %c1_i32_23 = arith.constant 1 : i32
    %49 = vector.broadcast %c1_i32_23 : i32 to vector<1x256xi32>
    %50 = arith.addi %16, %49 : vector<1x256xi32>
    %c16_i32_24 = arith.constant 16 : i32
    %51 = vector.broadcast %c16_i32_24 : i32 to vector<1x256xi32>
    %52 = arith.cmpi slt, %50, %51 : vector<1x256xi32>
    %53 = arith.andi %48, %52 : vector<1x256xi1>
    %cst_25 = arith.constant 0.000000e+00 : f32
    %54 = vector.shape_cast %53 : vector<1x256xi1> to vector<1x256xi1>
    %55 = vector.broadcast %54 : vector<1x256xi1> to vector<4x256xi1>
    %56 = vector.broadcast %cst_25 : f32 to vector<4x256xf32>
    %57 = arith.select %55, %44, %56 : vector<4x256xi1>, vector<4x256xf32>
    %c2_26 = arith.constant 2 : index
    %c0_27 = arith.constant 0 : index
    %c0_28 = arith.constant 0 : index
    %58 = vector.load %arg2[%c2_26, %c0_27, %c0_28] : memref<9x4x4xf32, #tpu.memory_space<vmem>>, vector<1x4x4xf32>
    %59 = vector.shape_cast %58 : vector<1x4x4xf32> to vector<4x4xf32>
    %cst_29 = arith.constant dense<0.000000e+00> : vector<4x256xf32>
    %60 = tpu.matmul %59, %57, %cst_29 {dimension_numbers = #tpu.dot_dimension_numbers<[1], [0], [0], [1], [0, 0, 1, 1], [], []>} : vector<4x4xf32>, vector<4x256xf32>, vector<4x256xf32> -> vector<4x256xf32>
    %61 = arith.addf %42, %60 : vector<4x256xf32>
    %c0_30 = arith.constant 0 : index
    %c0_31 = arith.constant 0 : index
    %c16 = arith.constant 16 : index
    %62 = vector.load %arg1[%c0_30, %c0_31, %c16] : memref<1x4x290xf32, #tpu.memory_space<vmem>>, vector<1x4x256xf32>
    %63 = vector.shape_cast %62 : vector<1x4x256xf32> to vector<4x256xf32>
    %c-1_i32_32 = arith.constant -1 : i32
    %64 = vector.broadcast %c-1_i32_32 : i32 to vector<1x256xi32>
    %65 = arith.addi %16, %64 : vector<1x256xi32>
    %c0_i32_33 = arith.constant 0 : i32
    %66 = vector.broadcast %c0_i32_33 : i32 to vector<1x256xi32>
    %67 = arith.cmpi sge, %65, %66 : vector<1x256xi32>
    %c-1_i32_34 = arith.constant -1 : i32
    %68 = vector.broadcast %c-1_i32_34 : i32 to vector<1x256xi32>
    %69 = arith.addi %16, %68 : vector<1x256xi32>
    %c16_i32_35 = arith.constant 16 : i32
    %70 = vector.broadcast %c16_i32_35 : i32 to vector<1x256xi32>
    %71 = arith.cmpi slt, %69, %70 : vector<1x256xi32>
    %72 = arith.andi %67, %71 : vector<1x256xi1>
    %cst_36 = arith.constant 0.000000e+00 : f32
    %73 = vector.shape_cast %72 : vector<1x256xi1> to vector<1x256xi1>
    %74 = vector.broadcast %73 : vector<1x256xi1> to vector<4x256xi1>
    %75 = vector.broadcast %cst_36 : f32 to vector<4x256xf32>
    %76 = arith.select %74, %63, %75 : vector<4x256xi1>, vector<4x256xf32>
    %c3 = arith.constant 3 : index
    %c0_37 = arith.constant 0 : index
    %c0_38 = arith.constant 0 : index
    %77 = vector.load %arg2[%c3, %c0_37, %c0_38] : memref<9x4x4xf32, #tpu.memory_space<vmem>>, vector<1x4x4xf32>
    %78 = vector.shape_cast %77 : vector<1x4x4xf32> to vector<4x4xf32>
    %cst_39 = arith.constant dense<0.000000e+00> : vector<4x256xf32>
    %79 = tpu.matmul %78, %76, %cst_39 {dimension_numbers = #tpu.dot_dimension_numbers<[1], [0], [0], [1], [0, 0, 1, 1], [], []>} : vector<4x4xf32>, vector<4x256xf32>, vector<4x256xf32> -> vector<4x256xf32>
    %80 = arith.addf %61, %79 : vector<4x256xf32>
    %c0_40 = arith.constant 0 : index
    %c0_41 = arith.constant 0 : index
    %c17 = arith.constant 17 : index
    %81 = vector.load %arg1[%c0_40, %c0_41, %c17] : memref<1x4x290xf32, #tpu.memory_space<vmem>>, vector<1x4x256xf32>
    %82 = vector.shape_cast %81 : vector<1x4x256xf32> to vector<4x256xf32>
    %c4 = arith.constant 4 : index
    %c0_42 = arith.constant 0 : index
    %c0_43 = arith.constant 0 : index
    %83 = vector.load %arg2[%c4, %c0_42, %c0_43] : memref<9x4x4xf32, #tpu.memory_space<vmem>>, vector<1x4x4xf32>
    %84 = vector.shape_cast %83 : vector<1x4x4xf32> to vector<4x4xf32>
    %cst_44 = arith.constant dense<0.000000e+00> : vector<4x256xf32>
    %85 = tpu.matmul %84, %82, %cst_44 {dimension_numbers = #tpu.dot_dimension_numbers<[1], [0], [0], [1], [0, 0, 1, 1], [], []>} : vector<4x4xf32>, vector<4x256xf32>, vector<4x256xf32> -> vector<4x256xf32>
    %86 = arith.addf %80, %85 : vector<4x256xf32>
    %c0_45 = arith.constant 0 : index
    %c0_46 = arith.constant 0 : index
    %c18 = arith.constant 18 : index
    %87 = vector.load %arg1[%c0_45, %c0_46, %c18] : memref<1x4x290xf32, #tpu.memory_space<vmem>>, vector<1x4x256xf32>
    %88 = vector.shape_cast %87 : vector<1x4x256xf32> to vector<4x256xf32>
    %c1_i32_47 = arith.constant 1 : i32
    %89 = vector.broadcast %c1_i32_47 : i32 to vector<1x256xi32>
    %90 = arith.addi %16, %89 : vector<1x256xi32>
    %c0_i32_48 = arith.constant 0 : i32
    %91 = vector.broadcast %c0_i32_48 : i32 to vector<1x256xi32>
    %92 = arith.cmpi sge, %90, %91 : vector<1x256xi32>
    %c1_i32_49 = arith.constant 1 : i32
    %93 = vector.broadcast %c1_i32_49 : i32 to vector<1x256xi32>
    %94 = arith.addi %16, %93 : vector<1x256xi32>
    %c16_i32_50 = arith.constant 16 : i32
    %95 = vector.broadcast %c16_i32_50 : i32 to vector<1x256xi32>
    %96 = arith.cmpi slt, %94, %95 : vector<1x256xi32>
    %97 = arith.andi %92, %96 : vector<1x256xi1>
    %cst_51 = arith.constant 0.000000e+00 : f32
    %98 = vector.shape_cast %97 : vector<1x256xi1> to vector<1x256xi1>
    %99 = vector.broadcast %98 : vector<1x256xi1> to vector<4x256xi1>
    %100 = vector.broadcast %cst_51 : f32 to vector<4x256xf32>
    %101 = arith.select %99, %88, %100 : vector<4x256xi1>, vector<4x256xf32>
    %c5 = arith.constant 5 : index
    %c0_52 = arith.constant 0 : index
    %c0_53 = arith.constant 0 : index
    %102 = vector.load %arg2[%c5, %c0_52, %c0_53] : memref<9x4x4xf32, #tpu.memory_space<vmem>>, vector<1x4x4xf32>
    %103 = vector.shape_cast %102 : vector<1x4x4xf32> to vector<4x4xf32>
    %cst_54 = arith.constant dense<0.000000e+00> : vector<4x256xf32>
    %104 = tpu.matmul %103, %101, %cst_54 {dimension_numbers = #tpu.dot_dimension_numbers<[1], [0], [0], [1], [0, 0, 1, 1], [], []>} : vector<4x4xf32>, vector<4x256xf32>, vector<4x256xf32> -> vector<4x256xf32>
    %105 = arith.addf %86, %104 : vector<4x256xf32>
    %c0_55 = arith.constant 0 : index
    %c0_56 = arith.constant 0 : index
    %c32 = arith.constant 32 : index
    %106 = vector.load %arg1[%c0_55, %c0_56, %c32] : memref<1x4x290xf32, #tpu.memory_space<vmem>>, vector<1x4x256xf32>
    %107 = vector.shape_cast %106 : vector<1x4x256xf32> to vector<4x256xf32>
    %c-1_i32_57 = arith.constant -1 : i32
    %108 = vector.broadcast %c-1_i32_57 : i32 to vector<1x256xi32>
    %109 = arith.addi %16, %108 : vector<1x256xi32>
    %c0_i32_58 = arith.constant 0 : i32
    %110 = vector.broadcast %c0_i32_58 : i32 to vector<1x256xi32>
    %111 = arith.cmpi sge, %109, %110 : vector<1x256xi32>
    %c-1_i32_59 = arith.constant -1 : i32
    %112 = vector.broadcast %c-1_i32_59 : i32 to vector<1x256xi32>
    %113 = arith.addi %16, %112 : vector<1x256xi32>
    %c16_i32_60 = arith.constant 16 : i32
    %114 = vector.broadcast %c16_i32_60 : i32 to vector<1x256xi32>
    %115 = arith.cmpi slt, %113, %114 : vector<1x256xi32>
    %116 = arith.andi %111, %115 : vector<1x256xi1>
    %cst_61 = arith.constant 0.000000e+00 : f32
    %117 = vector.shape_cast %116 : vector<1x256xi1> to vector<1x256xi1>
    %118 = vector.broadcast %117 : vector<1x256xi1> to vector<4x256xi1>
    %119 = vector.broadcast %cst_61 : f32 to vector<4x256xf32>
    %120 = arith.select %118, %107, %119 : vector<4x256xi1>, vector<4x256xf32>
    %c6 = arith.constant 6 : index
    %c0_62 = arith.constant 0 : index
    %c0_63 = arith.constant 0 : index
    %121 = vector.load %arg2[%c6, %c0_62, %c0_63] : memref<9x4x4xf32, #tpu.memory_space<vmem>>, vector<1x4x4xf32>
    %122 = vector.shape_cast %121 : vector<1x4x4xf32> to vector<4x4xf32>
    %cst_64 = arith.constant dense<0.000000e+00> : vector<4x256xf32>
    %123 = tpu.matmul %122, %120, %cst_64 {dimension_numbers = #tpu.dot_dimension_numbers<[1], [0], [0], [1], [0, 0, 1, 1], [], []>} : vector<4x4xf32>, vector<4x256xf32>, vector<4x256xf32> -> vector<4x256xf32>
    %124 = arith.addf %105, %123 : vector<4x256xf32>
    %c0_65 = arith.constant 0 : index
    %c0_66 = arith.constant 0 : index
    %c33 = arith.constant 33 : index
    %125 = vector.load %arg1[%c0_65, %c0_66, %c33] : memref<1x4x290xf32, #tpu.memory_space<vmem>>, vector<1x4x256xf32>
    %126 = vector.shape_cast %125 : vector<1x4x256xf32> to vector<4x256xf32>
    %c7 = arith.constant 7 : index
    %c0_67 = arith.constant 0 : index
    %c0_68 = arith.constant 0 : index
    %127 = vector.load %arg2[%c7, %c0_67, %c0_68] : memref<9x4x4xf32, #tpu.memory_space<vmem>>, vector<1x4x4xf32>
    %128 = vector.shape_cast %127 : vector<1x4x4xf32> to vector<4x4xf32>
    %cst_69 = arith.constant dense<0.000000e+00> : vector<4x256xf32>
    %129 = tpu.matmul %128, %126, %cst_69 {dimension_numbers = #tpu.dot_dimension_numbers<[1], [0], [0], [1], [0, 0, 1, 1], [], []>} : vector<4x4xf32>, vector<4x256xf32>, vector<4x256xf32> -> vector<4x256xf32>
    %130 = arith.addf %124, %129 : vector<4x256xf32>
    %c0_70 = arith.constant 0 : index
    %c0_71 = arith.constant 0 : index
    %c34 = arith.constant 34 : index
    %131 = vector.load %arg1[%c0_70, %c0_71, %c34] : memref<1x4x290xf32, #tpu.memory_space<vmem>>, vector<1x4x256xf32>
    %132 = vector.shape_cast %131 : vector<1x4x256xf32> to vector<4x256xf32>
    %c1_i32_72 = arith.constant 1 : i32
    %133 = vector.broadcast %c1_i32_72 : i32 to vector<1x256xi32>
    %134 = arith.addi %16, %133 : vector<1x256xi32>
    %c0_i32_73 = arith.constant 0 : i32
    %135 = vector.broadcast %c0_i32_73 : i32 to vector<1x256xi32>
    %136 = arith.cmpi sge, %134, %135 : vector<1x256xi32>
    %c1_i32_74 = arith.constant 1 : i32
    %137 = vector.broadcast %c1_i32_74 : i32 to vector<1x256xi32>
    %138 = arith.addi %16, %137 : vector<1x256xi32>
    %c16_i32_75 = arith.constant 16 : i32
    %139 = vector.broadcast %c16_i32_75 : i32 to vector<1x256xi32>
    %140 = arith.cmpi slt, %138, %139 : vector<1x256xi32>
    %141 = arith.andi %136, %140 : vector<1x256xi1>
    %cst_76 = arith.constant 0.000000e+00 : f32
    %142 = vector.shape_cast %141 : vector<1x256xi1> to vector<1x256xi1>
    %143 = vector.broadcast %142 : vector<1x256xi1> to vector<4x256xi1>
    %144 = vector.broadcast %cst_76 : f32 to vector<4x256xf32>
    %145 = arith.select %143, %132, %144 : vector<4x256xi1>, vector<4x256xf32>
    %c8 = arith.constant 8 : index
    %c0_77 = arith.constant 0 : index
    %c0_78 = arith.constant 0 : index
    %146 = vector.load %arg2[%c8, %c0_77, %c0_78] : memref<9x4x4xf32, #tpu.memory_space<vmem>>, vector<1x4x4xf32>
    %147 = vector.shape_cast %146 : vector<1x4x4xf32> to vector<4x4xf32>
    %cst_79 = arith.constant dense<0.000000e+00> : vector<4x256xf32>
    %148 = tpu.matmul %147, %145, %cst_79 {dimension_numbers = #tpu.dot_dimension_numbers<[1], [0], [0], [1], [0, 0, 1, 1], [], []>} : vector<4x4xf32>, vector<4x256xf32>, vector<4x256xf32> -> vector<4x256xf32>
    %149 = arith.addf %130, %148 : vector<4x256xf32>
    %c0_80 = arith.constant 0 : index
    %c0_81 = arith.constant 0 : index
    %c0_82 = arith.constant 0 : index
    %150 = vector.load %arg3[%c0_80, %c0_81, %c0_82] : memref<1x4x256xf32, #tpu.memory_space<vmem>>, vector<1x4x256xf32>
    %151 = vector.shape_cast %150 : vector<1x4x256xf32> to vector<4x256xf32>
    %152 = vector.shape_cast %149 : vector<4x256xf32> to vector<1x4x256xf32>
    tpu.vector_store %arg3[%c0_80, %c0_81, %c0_82], %152 {strides = array<i32>} : memref<1x4x256xf32, #tpu.memory_space<vmem>>, vector<1x4x256xf32>,
    %cst_83 = arith.constant dense<0.000000e+00> : vector<4xf32>
    %153 = vector.multi_reduction <add>, %149, %cst_83 [1] : vector<4x256xf32> to vector<4xf32>
    %154 = vector.shape_cast %153 : vector<4xf32> to vector<4x1xf32>
    %c0_84 = arith.constant 0 : index
    %c0_85 = arith.constant 0 : index
    %c0_86 = arith.constant 0 : index
    %155 = vector.load %arg4[%c0_84, %c0_85, %c0_86] : memref<1x4x2xf32, #tpu.memory_space<vmem>>, vector<1x4x1xf32>
    %156 = vector.shape_cast %155 : vector<1x4x1xf32> to vector<4x1xf32>
    %157 = vector.shape_cast %154 : vector<4x1xf32> to vector<1x4x1xf32>
    tpu.vector_store %arg4[%c0_84, %c0_85, %c0_86], %157 {strides = array<i32>} : memref<1x4x2xf32, #tpu.memory_space<vmem>>, vector<1x4x1xf32>,
    %158 = arith.mulf %149, %149 : vector<4x256xf32>
    %cst_87 = arith.constant dense<0.000000e+00> : vector<4xf32>
    %159 = vector.multi_reduction <add>, %158, %cst_87 [1] : vector<4x256xf32> to vector<4xf32>
    %160 = vector.shape_cast %159 : vector<4xf32> to vector<4x1xf32>
    %c0_88 = arith.constant 0 : index
    %c0_89 = arith.constant 0 : index
    %c1_90 = arith.constant 1 : index
    %161 = vector.load %arg4[%c0_88, %c0_89, %c1_90] : memref<1x4x2xf32, #tpu.memory_space<vmem>>, vector<1x4x1xf32>
    %162 = vector.shape_cast %161 : vector<1x4x1xf32> to vector<4x1xf32>
    %163 = vector.shape_cast %160 : vector<4x1xf32> to vector<1x4x1xf32>
    tpu.vector_store %arg4[%c0_88, %c0_89, %c1_90], %163 {strides = array<i32>} : memref<1x4x2xf32, #tpu.memory_space<vmem>>, vector<1x4x1xf32>,
    return
  }
  func.func @transform_0(%arg0: i32) -> (i32, i32, i32) {
    %c0_i32 = arith.constant 0 : i32
    %c0_i32_0 = arith.constant 0 : i32
    %c0_i32_1 = arith.constant 0 : i32
    return %arg0, %c0_i32, %c0_i32_0 : i32, i32, i32
  }
  func.func @transform_1(%arg0: i32) -> (i32, i32, i32) {
    %c0_i32 = arith.constant 0 : i32
    %c0_i32_0 = arith.constant 0 : i32
    %c0_i32_1 = arith.constant 0 : i32
    %c0_i32_2 = arith.constant 0 : i32
    return %c0_i32, %c0_i32_0, %c0_i32_1 : i32, i32, i32
  }
  func.func @transform_2(%arg0: i32) -> (i32, i32, i32) {
    %c0_i32 = arith.constant 0 : i32
    %c0_i32_0 = arith.constant 0 : i32
    %c0_i32_1 = arith.constant 0 : i32
    return %arg0, %c0_i32, %c0_i32_0 : i32, i32, i32
  }
  func.func @transform_3(%arg0: i32) -> (i32, i32, i32) {
    %c0_i32 = arith.constant 0 : i32
    %c0_i32_0 = arith.constant 0 : i32
    %c0_i32_1 = arith.constant 0 : i32
    return %arg0, %c0_i32, %c0_i32_0 : i32, i32, i32
  }
}

module attributes {stable_mosaic.version = 11 : i64} {
  func.func @_bn_scale_kernel(%arg0: i32, %arg1: i32, %arg2: memref<1x4x256xf32, #tpu.memory_space<vmem>>, %arg3: memref<2x4x2xf32, #tpu.memory_space<vmem>>, %arg4: memref<4x1xf32, #tpu.memory_space<vmem>>, %arg5: memref<4x1xf32, #tpu.memory_space<vmem>>, %arg6: memref<1x4x256xf32, #tpu.memory_space<vmem>>) attributes {dimension_semantics = [#tpu.dimension_semantics<parallel>, #tpu.dimension_semantics<parallel>], iteration_bounds = array<i64: 2, 1>, scalar_prefetch = 0 : i64, scratch_operands = 0 : i64, tpu.core_type = #tpu.core_type<tc>, window_params = [{transform_indices = @transform_0, window_bounds = array<i64: 1, 4, 256>}, {pipeline_mode = #tpu.pipeline_mode<synchronous>, transform_indices = @transform_1, window_bounds = array<i64: 2, 4, 2>}, {pipeline_mode = #tpu.pipeline_mode<synchronous>, transform_indices = @transform_2, window_bounds = array<i64: 4, 1>}, {pipeline_mode = #tpu.pipeline_mode<synchronous>, transform_indices = @transform_3, window_bounds = array<i64: 4, 1>}, {transform_indices = @transform_4, window_bounds = array<i64: 1, 4, 256>}]} {
    %c0 = arith.constant 0 : index
    %c0_0 = arith.constant 0 : index
    %c0_1 = arith.constant 0 : index
    %0 = vector.load %arg3[%c0, %c0_0, %c0_1] : memref<2x4x2xf32, #tpu.memory_space<vmem>>, vector<2x4x2xf32>
    %cst = arith.constant dense<0.000000e+00> : vector<4x2xf32>
    %1 = vector.multi_reduction <add>, %0, %cst [0] : vector<2x4x2xf32> to vector<4x2xf32>
    %2 = vector.extract_strided_slice %1 {offsets = [0, 0], sizes = [4, 1], strides = [1, 1]} : vector<4x2xf32> to vector<4x1xf32>
    %cst_2 = arith.constant 0.001953125 : f32
    %3 = vector.broadcast %cst_2 : f32 to vector<4x1xf32>
    %4 = arith.mulf %2, %3 : vector<4x1xf32>
    %5 = vector.extract_strided_slice %1 {offsets = [0, 1], sizes = [4, 1], strides = [1, 1]} : vector<4x2xf32> to vector<4x1xf32>
    %cst_3 = arith.constant 0.001953125 : f32
    %6 = vector.broadcast %cst_3 : f32 to vector<4x1xf32>
    %7 = arith.mulf %5, %6 : vector<4x1xf32>
    %8 = arith.mulf %4, %4 : vector<4x1xf32>
    %9 = arith.subf %7, %8 : vector<4x1xf32>
    %c0_4 = arith.constant 0 : index
    %c0_5 = arith.constant 0 : index
    %10 = vector.load %arg4[%c0_4, %c0_5] : memref<4x1xf32, #tpu.memory_space<vmem>>, vector<4x1xf32>
    %cst_6 = arith.constant 9.99999974E-6 : f32
    %11 = vector.broadcast %cst_6 : f32 to vector<4x1xf32>
    %12 = arith.addf %9, %11 : vector<4x1xf32>
    %13 = math.rsqrt %12 : vector<4x1xf32>
    %14 = arith.mulf %10, %13 : vector<4x1xf32>
    %c0_7 = arith.constant 0 : index
    %c0_8 = arith.constant 0 : index
    %15 = vector.load %arg5[%c0_7, %c0_8] : memref<4x1xf32, #tpu.memory_space<vmem>>, vector<4x1xf32>
    %16 = arith.mulf %4, %14 : vector<4x1xf32>
    %17 = arith.subf %15, %16 : vector<4x1xf32>
    %c0_9 = arith.constant 0 : index
    %c0_10 = arith.constant 0 : index
    %c0_11 = arith.constant 0 : index
    %18 = vector.load %arg2[%c0_9, %c0_10, %c0_11] : memref<1x4x256xf32, #tpu.memory_space<vmem>>, vector<1x4x256xf32>
    %19 = vector.shape_cast %18 : vector<1x4x256xf32> to vector<4x256xf32>
    %20 = vector.broadcast %14 : vector<4x1xf32> to vector<4x256xf32>
    %21 = arith.mulf %19, %20 : vector<4x256xf32>
    %22 = vector.broadcast %17 : vector<4x1xf32> to vector<4x256xf32>
    %23 = arith.addf %21, %22 : vector<4x256xf32>
    %c0_12 = arith.constant 0 : index
    %c0_13 = arith.constant 0 : index
    %c0_14 = arith.constant 0 : index
    %24 = vector.load %arg6[%c0_12, %c0_13, %c0_14] : memref<1x4x256xf32, #tpu.memory_space<vmem>>, vector<1x4x256xf32>
    %25 = vector.shape_cast %24 : vector<1x4x256xf32> to vector<4x256xf32>
    %26 = vector.shape_cast %23 : vector<4x256xf32> to vector<1x4x256xf32>
    tpu.vector_store %arg6[%c0_12, %c0_13, %c0_14], %26 {strides = array<i32>} : memref<1x4x256xf32, #tpu.memory_space<vmem>>, vector<1x4x256xf32>,
    return
  }
  func.func @transform_0(%arg0: i32, %arg1: i32) -> (i32, i32, i32) {
    %c0_i32 = arith.constant 0 : i32
    %c0_i32_0 = arith.constant 0 : i32
    return %arg0, %c0_i32, %arg1 : i32, i32, i32
  }
  func.func @transform_1(%arg0: i32, %arg1: i32) -> (i32, i32, i32) {
    %c0_i32 = arith.constant 0 : i32
    %c0_i32_0 = arith.constant 0 : i32
    %c0_i32_1 = arith.constant 0 : i32
    %c0_i32_2 = arith.constant 0 : i32
    return %c0_i32, %c0_i32_0, %c0_i32_1 : i32, i32, i32
  }
  func.func @transform_2(%arg0: i32, %arg1: i32) -> (i32, i32) {
    %c0_i32 = arith.constant 0 : i32
    %c0_i32_0 = arith.constant 0 : i32
    %c0_i32_1 = arith.constant 0 : i32
    return %c0_i32, %c0_i32_0 : i32, i32
  }
  func.func @transform_3(%arg0: i32, %arg1: i32) -> (i32, i32) {
    %c0_i32 = arith.constant 0 : i32
    %c0_i32_0 = arith.constant 0 : i32
    %c0_i32_1 = arith.constant 0 : i32
    return %c0_i32, %c0_i32_0 : i32, i32
  }
  func.func @transform_4(%arg0: i32, %arg1: i32) -> (i32, i32, i32) {
    %c0_i32 = arith.constant 0 : i32
    %c0_i32_0 = arith.constant 0 : i32
    return %arg0, %c0_i32, %arg1 : i32, i32, i32
  }
}

</mosaic_0001>

<llo_original>
// kernel: conv_block.3
$region0: #{conv_block.3}
  #allocation0 [shape = 'u32[]', space=smem, size = 0x4, offset = 0x4, fixed_abs, tag = 'smem constant byte address 0x4 - core index']
  #allocation1 [shape = 'u32[144,128]{1,0:T(1,128)}', space=vmem, size = 0x12000, scoped, tag = 'internal scratch']
  %s0 = inlined_call_operand.vmem [shape: f32[2,4,256], index: 0, kind: input, shape index: {}, may-alias: {0,4}]
  %s1 = inlined_call_operand.vmem [shape: f32[2,4,2], index: 1, kind: input, shape index: {}]
  %s2 = inlined_call_operand.vmem [shape: f32[4,1], index: 2, kind: input, shape index: {}]
  %s3 = inlined_call_operand.vmem [shape: f32[4,1], index: 3, kind: input, shape index: {}]
  %s4 = inlined_call_operand.vmem [shape: f32[2,4,256], index: 4, kind: output, shape index: {}, may-alias: {0,4}]
  %s5 = sld [smem:[#allocation0]]
  $region49: #{conv_block.3} parent=0
    _
  %s7 = ssub.s32 1, %s5
  %s8 = scalar_select 0, %s7, %s5
  loop: start=0, step=1, limit=4
  $region2: #{conv_block.3} parent=0 // loop_pre_header
    _
  $region3: #{conv_block.3} parent=0 // loop_header
    %s10 = sphi 0, %s14
    %p11 = scmp.ge.s32.totalorder %s10, 4
    %s17 = sphi 0, %s29
    %s18 = sphi 0, %s25
    %s19 = sphi 0, %s17
    %s20 = sphi 0, %s18
    %s21 = sphi 0, %s19
    %s22 = sphi 0, %s20
    %s34 = sphi 0, %s36
    %s37 = sphi 0, %s34
    %s38 = sphi 0, %s37
    %s54 = sphi 0, %s38
    %s58 = sphi 0, %s58
    %s60 = sphi 0, %s58
    %s61 = sphi 0, %s60
    %s75 = sphi 0, %s61
    %s79 = sphi 0, %s79
    %s81 = sphi 0, %s79
    %s82 = sphi 0, %s81
    %s96 = sphi 0, %s82
    %s100 = sphi 0, %s100
    %s102 = sphi 0, %s100
    %s103 = sphi 0, %s102
    %s117 = sphi 0, %s103
    %s125 = sphi 0, %s127
    %s128 = sphi 0, %s125
    %s129 = sphi 0, %s128
    %s145 = sphi 0, %s129
  $region4: #{conv_block.3} parent=0 // loop_header_branch
    %13 = sbr.rel (%p11) target = $region8
  $region5: #{conv_block.3} parent=0 // loop_body
    %s15 = ssub.s32 %s10, 1
    %s16 = ssub.s32 %s10, 2
    %s23 = sadd.s32 1, %s18
    %p24 = scmp.ge.s32.totalorder %s23, 1
    %s25 = scalar_select %p24, 0, %s23
    %s26 = sadd.s32 1, %s17
    %s27 = scalar_select %p24, %s26, %s17
    %p28 = scmp.ge.s32.totalorder %s27, 2
    %s29 = scalar_select %p28, 0, %s27
    %s30 = ssub.s32 %s17, %s29
    %s31 = ssub.s32 %s18, %s25
    %s32 = sor.u32 %s30, %s31
    %p33 = scmp.eq.s32.totalorder %s32, 0
    %s35 = sadd.s32 %s34, 1
    %s36 = scalar_select %p33, %s34, %s35
    %p39 = pneg %p33
    %p40 = scmp.eq.s32.totalorder %s10, 1
    %p41 = por %p39, %p40
    %p42 = scmp.ne.s32.totalorder %s34, %s37
    %p43 = scmp.eq.s32.totalorder %s10, 0
    %p44 = por %p42, %p43
    %p45 = scmp.ne.s32.totalorder %s34, %s37
    %p46 = scmp.eq.s32.totalorder %s15, 1
    %p47 = por %p45, %p46
    %p48 = scmp.ne.s32.totalorder %s37, %s38
    %p49 = scmp.eq.s32.totalorder %s15, 0
    %p50 = por %p48, %p49
    %p51 = scmp.ne.s32.totalorder %s37, %s38
    %p52 = scmp.eq.s32.totalorder %s16, 1
    %p53 = por %p51, %p52
    %p55 = scmp.ne.s32.totalorder %s38, %s54
    %p56 = scmp.eq.s32.totalorder %s16, 0
    %p57 = por %p55, %p56
    %s59 = sadd.s32 %s58, 1
    %p62 = scmp.eq.s32.totalorder %s10, 1
    %p63 = scmp.ne.s32.totalorder %s58, %s60
    %p64 = scmp.eq.s32.totalorder %s10, 0
    %p65 = por %p63, %p64
    %p66 = scmp.ne.s32.totalorder %s58, %s60
    %p67 = scmp.eq.s32.totalorder %s15, 1
    %p68 = por %p66, %p67
    %p69 = scmp.ne.s32.totalorder %s60, %s61
    %p70 = scmp.eq.s32.totalorder %s15, 0
    %p71 = por %p69, %p70
    %p72 = scmp.ne.s32.totalorder %s60, %s61
    %p73 = scmp.eq.s32.totalorder %s16, 1
    %p74 = por %p72, %p73
    %p76 = scmp.ne.s32.totalorder %s61, %s75
    %p77 = scmp.eq.s32.totalorder %s16, 0
    %p78 = por %p76, %p77
    %s80 = sadd.s32 %s79, 1
    %p83 = scmp.eq.s32.totalorder %s10, 1
    %p84 = scmp.ne.s32.totalorder %s79, %s81
    %p85 = scmp.eq.s32.totalorder %s10, 0
    %p86 = por %p84, %p85
    %p87 = scmp.ne.s32.totalorder %s79, %s81
    %p88 = scmp.eq.s32.totalorder %s15, 1
    %p89 = por %p87, %p88
    %p90 = scmp.ne.s32.totalorder %s81, %s82
    %p91 = scmp.eq.s32.totalorder %s15, 0
    %p92 = por %p90, %p91
    %p93 = scmp.ne.s32.totalorder %s81, %s82
    %p94 = scmp.eq.s32.totalorder %s16, 1
    %p95 = por %p93, %p94
    %p97 = scmp.ne.s32.totalorder %s82, %s96
    %p98 = scmp.eq.s32.totalorder %s16, 0
    %p99 = por %p97, %p98
    %s101 = sadd.s32 %s100, 1
    %p104 = scmp.eq.s32.totalorder %s10, 1
    %p105 = scmp.ne.s32.totalorder %s100, %s102
    %p106 = scmp.eq.s32.totalorder %s10, 0
    %p107 = por %p105, %p106
    %p108 = scmp.ne.s32.totalorder %s100, %s102
    %p109 = scmp.eq.s32.totalorder %s15, 1
    %p110 = por %p108, %p109
    %p111 = scmp.ne.s32.totalorder %s102, %s103
    %p112 = scmp.eq.s32.totalorder %s15, 0
    %p113 = por %p111, %p112
    %p114 = scmp.ne.s32.totalorder %s102, %s103
    %p115 = scmp.eq.s32.totalorder %s16, 1
    %p116 = por %p114, %p115
    %p118 = scmp.ne.s32.totalorder %s103, %s117
    %p119 = scmp.eq.s32.totalorder %s16, 0
    %p120 = por %p118, %p119
    %s121 = ssub.s32 %s17, %s29
    %s122 = ssub.s32 %s18, %s25
    %s123 = sor.u32 %s121, %s122
    %p124 = scmp.eq.s32.totalorder %s123, 0
    %s126 = sadd.s32 %s125, 1
    %s127 = scalar_select %p124, %s125, %s126
    %p130 = pneg %p124
    %p131 = scmp.eq.s32.totalorder %s10, 1
    %p132 = por %p130, %p131
    %p133 = scmp.ne.s32.totalorder %s125, %s128
    %p134 = scmp.eq.s32.totalorder %s10, 0
    %p135 = por %p133, %p134
    %p136 = scmp.ne.s32.totalorder %s125, %s128
    %p137 = scmp.eq.s32.totalorder %s15, 1
    %p138 = por %p136, %p137
    %p139 = scmp.ne.s32.totalorder %s128, %s129
    %p140 = scmp.eq.s32.totalorder %s15, 0
    %p141 = por %p139, %p140
    %p142 = scmp.ne.s32.totalorder %s128, %s129
    %p143 = scmp.eq.s32.totalorder %s16, 1
    %p144 = por %p142, %p143
    %p146 = scmp.ne.s32.totalorder %s129, %s145
    %p147 = scmp.eq.s32.totalorder %s16, 0
    %p148 = por %p146, %p147
    %p149 = scmp.le.s32.totalorder 1, %s10
    %p150 = scmp.lt.s32.totalorder %s10, 3
    %p151 = pnand %p149, %p150
    %p152 = pneg %p151
    // Predicated region
    $region9: #{conv_block.3} parent=5 // pred_check
      _
    $region10: #{conv_block.3} parent=5 // pred_check_branch
      %154 = sbr.rel (%p151) target = $region12
    $region11: #{conv_block.3} parent=5 // pred_region
      %s155 = ssub.s32 %s10, 1
      // Predicated region
      $region13: #{conv_block.3} parent=11 // pred_check
        %p156 = pneg %p71
      $region14: #{conv_block.3} parent=11 // pred_check_branch
        %158 = sbr.rel (%p156) target = $region16
      $region15: #{conv_block.3} parent=11 // pred_region
        _
      $region16: #{conv_block.3} parent=11 // pred_fallthru
        _
      // Predicated region
      $region17: #{conv_block.3} parent=11 // pred_check
        %p159 = pneg %p92
      $region18: #{conv_block.3} parent=11 // pred_check_branch
        %161 = sbr.rel (%p159) target = $region20
      $region19: #{conv_block.3} parent=11 // pred_region
        _
      $region20: #{conv_block.3} parent=11 // pred_fallthru
        _
      // Predicated region
      $region21: #{conv_block.3} parent=11 // pred_check
        %p162 = pneg %p113
      $region22: #{conv_block.3} parent=11 // pred_check_branch
        %164 = sbr.rel (%p162) target = $region24
      $region23: #{conv_block.3} parent=11 // pred_region
        _
      $region24: #{conv_block.3} parent=11 // pred_fallthru
        _
    $region12: #{conv_block.3} parent=5 // pred_fallthru
      _
    %p165 = scmp.lt.s32.totalorder %s10, 2
    // Predicated region
    $region25: #{conv_block.3} parent=5 // pred_check
      %p166 = pneg %p165
    $region26: #{conv_block.3} parent=5 // pred_check_branch
      %168 = sbr.rel (%p166) target = $region28
    $region27: #{conv_block.3} parent=5 // pred_region
      // Predicated region
      $region29: #{conv_block.3} parent=27 // pred_check
        %p169 = pneg %p44
      $region30: #{conv_block.3} parent=27 // pred_check_branch
        %171 = sbr.rel (%p169) target = $region32
      $region31: #{conv_block.3} parent=27 // pred_region
        %s172 = smul.u32 2, %s18
        %p173 = scmp.lt.s32.totalorder %s17, 1
        %s174 = scalar_select %p173, %s17, 1
        %p175 = scmp.lt.s32.totalorder %s172, 1
        %s176 = scalar_select %p175, %s172, 1
        %s177 = smul.addr %s174, 2
        %s178 = sadd.s32 %s176, %s177
        %s179 = smul.addr %s178, 4
        %s180 = scalar_lea.vmem %s0, %s179
        %s181 = smul.u32 2, %s18
      $region32: #{conv_block.3} parent=27 // pred_fallthru
        _
    $region28: #{conv_block.3} parent=5 // pred_fallthru
      _
    %p182 = scmp.le.s32.totalorder 1, %s10
    %p183 = scmp.lt.s32.totalorder %s10, 3
    %p184 = pnand %p182, %p183
    %p185 = pneg %p184
    // Predicated region
    $region33: #{conv_block.3} parent=5 // pred_check
      _
    $region34: #{conv_block.3} parent=5 // pred_check_branch
      %187 = sbr.rel (%p184) target = $region36
    $region35: #{conv_block.3} parent=5 // pred_region
      %s188 = ssub.s32 %s10, 1
      %s189 = smul.u32 2, %s20
      %p190 = scmp.lt.s32.totalorder %s19, 1
      %s191 = scalar_select %p190, %s19, 1
      %p192 = scmp.lt.s32.totalorder %s189, 1
      %s193 = scalar_select %p192, %s189, 1
      %s194 = smul.addr %s191, 2
      %s195 = sadd.s32 %s193, %s194
      %s196 = smul.addr %s195, 4
      %s197 = scalar_lea.vmem %s0, %s196
      %p198 = pneg %p50
      %p199 = pneg %p47
      %p200 = pneg %p71
      %p201 = pneg %p68
      %p202 = pneg %p92
      %p203 = pneg %p89
      %p204 = pneg %p113
      %p205 = pneg %p110
      %p206 = pneg %p141
      %p207 = pneg %p138
      %s208 = smul.u32 2, %s20
      %p209 = scmp.lt.s32.totalorder %s19, 1
      %s210 = scalar_select %p209, %s19, 1
      %p211 = scmp.lt.s32.totalorder %s208, 1
      %s212 = scalar_select %p211, %s208, 1
      %s213 = smul.addr %s210, 2
      %s214 = sadd.s32 %s212, %s213
      %s215 = smul.addr %s214, 4
      %s216 = scalar_lea.vmem %s4, %s215
      %s217 = smul.u32 2, %s20
      %p218 = scmp.lt.s32.totalorder %s19, 1
      %s219 = scalar_select %p218, %s19, 1
      %p220 = scmp.lt.s32.totalorder %s217, 1
      %s221 = scalar_select %p220, %s217, 1
      %s222 = smul.addr %s219, 2
      %s223 = sadd.s32 %s221, %s222
      %s224 = smul.addr %s223, 4
      %s225 = scalar_lea.vmem %s0, %s224
      %s226 = smul.u32 2, %s20
      %s227 = smul.u32 2, %s20
      %p228 = scmp.lt.s32.totalorder %s19, 1
      %s229 = scalar_select %p228, %s19, 1
      %p230 = scmp.lt.s32.totalorder %s227, 1
      %s231 = scalar_select %p230, %s227, 1
      %s232 = smul.addr %s229, 2
      %s233 = sadd.s32 %s231, %s232
      %s234 = smul.addr %s233, 4
      %s235 = scalar_lea.vmem %s4, %s234
      %s236 = smul.u32 2, %s20
      %v237 = vld [vmem:[%s1] sm:$0xf]
      %v238 = vld [vmem:[%s1 + $0x4] sm:$0xf]
      %vm239 = vcmask 11264
      %v240 = vsel %vm239, %v237, 0.0
      %v241 = vsel %vm239, %v238, 0.0
      %v242 = vadd.f32 %v240, %v241
      %v243 = vmul.f32 %v242, 0.001953125
      %v244 = vmul.f32 %v243, %v243
      %246 = vrot.lane.b32.xlu0 %v244, 1
      %v247 = vpop.permute.xlu0 %246
      %v249 = vsub.f32 %v243, %v247
      %v250 = vld [vmem:[%s2] sm:$0xf]
      %v251 = vadd.f32 %v249, 1e-05
      %v252 = vrsqrt.pop %v251
      %254 = vrot.lane.b32.xlu0 %v252, 127
      %v255 = vpop.permute.xlu0 %254
      %v257 = vmul.f32 %v250, %v255
      %v258 = vld [vmem:[%s3] sm:$0xf]
      %v259 = vmul.f32 %v243, %v257
      %v260 = vsub.f32 %v258, %v259
      %v261 = vld [vmem:[%s225] sm:$0xff]
      %263 = vset.pattern.permute.xlu0 0
      %264 = vperm.xlu0 %263, %v257
      %v265 = vpop.permute.xlu0 %264
      %v267 = vunpack.c.l.s4 839922192
      %v268 = vunpack.c.0.s8 %v267
      %v269 = vlaneseq
      %v270 = vshrl.u32 %v269, 7
      %v271 = vsub.s32 %v268, %v270
      %v272 = vrot.slane %v265, %v271
      %v274 = vmul.f32 %v261, %v272
      %276 = vset.pattern.permute.xlu0 0
      %277 = vperm.xlu0 %276, %v260
      %v278 = vpop.permute.xlu0 %277
      %v280 = vunpack.c.l.s4 839922192
      %v281 = vunpack.c.0.s8 %v280
      %v282 = vlaneseq
      %v283 = vshrl.u32 %v282, 7
      %v284 = vsub.s32 %v281, %v283
      %v285 = vrot.slane %v278, %v284
      %v287 = vadd.f32 %v274, %v285
      %288 = vst [vmem:[%s235] sm:$0xff] %v287
      %s289 = smul.u32 2, %s20
      %p290 = scmp.lt.s32.totalorder %s19, 1
      %s291 = scalar_select %p290, %s19, 1
      %p292 = scmp.lt.s32.totalorder %s289, 1
      %s293 = scalar_select %p292, %s289, 1
      %s294 = smul.addr %s291, 2
      %s295 = sadd.s32 %s293, %s294
      %s296 = smul.addr %s295, 4
      %s297 = scalar_lea.vmem %s4, %s296
      // Predicated region
      $region37: #{conv_block.3} parent=35 // pred_check
        %p298 = pneg %p138
      $region38: #{conv_block.3} parent=35 // pred_check_branch
        %300 = sbr.rel (%p298) target = $region40
      $region39: #{conv_block.3} parent=35 // pred_region
        %s301 = smul.u32 2, %s20
      $region40: #{conv_block.3} parent=35 // pred_fallthru
        _
    $region36: #{conv_block.3} parent=5 // pred_fallthru
      _
    %p302 = scmp.le.s32.totalorder 2, %s10
    // Predicated region
    $region41: #{conv_block.3} parent=5 // pred_check
      %p303 = pneg %p302
    $region42: #{conv_block.3} parent=5 // pred_check_branch
      %305 = sbr.rel (%p303) target = $region44
    $region43: #{conv_block.3} parent=5 // pred_region
      %s306 = ssub.s32 %s10, 2
      // Predicated region
      $region45: #{conv_block.3} parent=43 // pred_check
        %p307 = pneg %p144
      $region46: #{conv_block.3} parent=43 // pred_check_branch
        %309 = sbr.rel (%p307) target = $region48
      $region47: #{conv_block.3} parent=43 // pred_region
        %s310 = smul.u32 2, %s22
        %p311 = scmp.lt.s32.totalorder %s21, 1
        %s312 = scalar_select %p311, %s21, 1
        %p313 = scmp.lt.s32.totalorder %s310, 1
        %s314 = scalar_select %p313, %s310, 1
        %s315 = smul.addr %s312, 2
        %s316 = sadd.s32 %s314, %s315
        %s317 = smul.addr %s316, 4
        %s318 = scalar_lea.vmem %s4, %s317
      $region48: #{conv_block.3} parent=43 // pred_fallthru
        _
    $region44: #{conv_block.3} parent=5 // pred_fallthru
      _
  $region6: #{conv_block.3} parent=0 // loop_footer
    %s14 = sadd.s32 1, %s10
  $region7: #{conv_block.3} parent=0 // loop_footer_branch
    %9 = sbr.rel target = $region3
  $region8: #{conv_block.3} parent=0 // loop_exit
    _

// kernel: conv_block.2
$region0: #{conv_block.2}
  #allocation0 [shape = 'u32[]', space=smem, size = 0x4, offset = 0x4, fixed_abs, tag = 'smem constant byte address 0x4 - core index']
  #allocation1 [shape = 'u32[144,128]{1,0:T(1,128)}', space=vmem, size = 0x12000, scoped, tag = 'internal scratch']
  %s0 = inlined_call_operand.vmem [shape: f32[2,4,290], index: 0, kind: input, shape index: {}]
  %s1 = inlined_call_operand.vmem [shape: f32[9,4,4], index: 1, kind: input, shape index: {}]
  %s2 = inlined_call_operand.vmem [shape: f32[2,4,256], index: 2, kind: output, shape index: {0}]
  %s3 = inlined_call_operand.vmem [shape: f32[2,4,2], index: 3, kind: output, shape index: {1}]
  %4 = xla_tuple %s2, %s3
  %s5 = sld [smem:[#allocation0]]
  $region49: #{conv_block.2} parent=0
    _
  %s7 = ssub.s32 1, %s5
  %s8 = scalar_select 0, %s7, %s5
  loop: start=0, step=1, limit=4
  $region2: #{conv_block.2} parent=0 // loop_pre_header
    _
  $region3: #{conv_block.2} parent=0 // loop_header
    %s10 = sphi 0, %s14
    %p11 = scmp.ge.s32.totalorder %s10, 4
    %s20 = sphi 0, %s22
    %s23 = sphi 0, %s20
    %s24 = sphi 0, %s23
    %s40 = sphi 0, %s24
    %s44 = sphi 0, %s44
    %s46 = sphi 0, %s44
    %s47 = sphi 0, %s46
    %s61 = sphi 0, %s47
    %s67 = sphi 0, %s69
    %s70 = sphi 0, %s67
    %s71 = sphi 0, %s70
    %s87 = sphi 0, %s71
    %s93 = sphi 0, %s95
    %s96 = sphi 0, %s93
    %s97 = sphi 0, %s96
    %s113 = sphi 0, %s97
  $region4: #{conv_block.2} parent=0 // loop_header_branch
    %13 = sbr.rel (%p11) target = $region8
  $region5: #{conv_block.2} parent=0 // loop_body
    %s15 = ssub.s32 %s10, 1
    %s16 = ssub.s32 %s10, 2
    %s17 = sadd.s32 %s10, 1
    %s18 = ssub.s32 %s10, %s17
    %p19 = scmp.eq.s32.totalorder %s18, 0
    %s21 = sadd.s32 %s20, 1
    %s22 = scalar_select %p19, %s20, %s21
    %p25 = pneg %p19
    %p26 = scmp.eq.s32.totalorder %s10, 1
    %p27 = por %p25, %p26
    %p28 = scmp.ne.s32.totalorder %s20, %s23
    %p29 = scmp.eq.s32.totalorder %s10, 0
    %p30 = por %p28, %p29
    %p31 = scmp.ne.s32.totalorder %s20, %s23
    %p32 = scmp.eq.s32.totalorder %s15, 1
    %p33 = por %p31, %p32
    %p34 = scmp.ne.s32.totalorder %s23, %s24
    %p35 = scmp.eq.s32.totalorder %s15, 0
    %p36 = por %p34, %p35
    %p37 = scmp.ne.s32.totalorder %s23, %s24
    %p38 = scmp.eq.s32.totalorder %s16, 1
    %p39 = por %p37, %p38
    %p41 = scmp.ne.s32.totalorder %s24, %s40
    %p42 = scmp.eq.s32.totalorder %s16, 0
    %p43 = por %p41, %p42
    %s45 = sadd.s32 %s44, 1
    %p48 = scmp.eq.s32.totalorder %s10, 1
    %p49 = scmp.ne.s32.totalorder %s44, %s46
    %p50 = scmp.eq.s32.totalorder %s10, 0
    %p51 = por %p49, %p50
    %p52 = scmp.ne.s32.totalorder %s44, %s46
    %p53 = scmp.eq.s32.totalorder %s15, 1
    %p54 = por %p52, %p53
    %p55 = scmp.ne.s32.totalorder %s46, %s47
    %p56 = scmp.eq.s32.totalorder %s15, 0
    %p57 = por %p55, %p56
    %p58 = scmp.ne.s32.totalorder %s46, %s47
    %p59 = scmp.eq.s32.totalorder %s16, 1
    %p60 = por %p58, %p59
    %p62 = scmp.ne.s32.totalorder %s47, %s61
    %p63 = scmp.eq.s32.totalorder %s16, 0
    %p64 = por %p62, %p63
    %s65 = ssub.s32 %s10, %s17
    %p66 = scmp.eq.s32.totalorder %s65, 0
    %s68 = sadd.s32 %s67, 1
    %s69 = scalar_select %p66, %s67, %s68
    %p72 = pneg %p66
    %p73 = scmp.eq.s32.totalorder %s10, 1
    %p74 = por %p72, %p73
    %p75 = scmp.ne.s32.totalorder %s67, %s70
    %p76 = scmp.eq.s32.totalorder %s10, 0
    %p77 = por %p75, %p76
    %p78 = scmp.ne.s32.totalorder %s67, %s70
    %p79 = scmp.eq.s32.totalorder %s15, 1
    %p80 = por %p78, %p79
    %p81 = scmp.ne.s32.totalorder %s70, %s71
    %p82 = scmp.eq.s32.totalorder %s15, 0
    %p83 = por %p81, %p82
    %p84 = scmp.ne.s32.totalorder %s70, %s71
    %p85 = scmp.eq.s32.totalorder %s16, 1
    %p86 = por %p84, %p85
    %p88 = scmp.ne.s32.totalorder %s71, %s87
    %p89 = scmp.eq.s32.totalorder %s16, 0
    %p90 = por %p88, %p89
    %s91 = ssub.s32 %s10, %s17
    %p92 = scmp.eq.s32.totalorder %s91, 0
    %s94 = sadd.s32 %s93, 1
    %s95 = scalar_select %p92, %s93, %s94
    %p98 = pneg %p92
    %p99 = scmp.eq.s32.totalorder %s10, 1
    %p100 = por %p98, %p99
    %p101 = scmp.ne.s32.totalorder %s93, %s96
    %p102 = scmp.eq.s32.totalorder %s10, 0
    %p103 = por %p101, %p102
    %p104 = scmp.ne.s32.totalorder %s93, %s96
    %p105 = scmp.eq.s32.totalorder %s15, 1
    %p106 = por %p104, %p105
    %p107 = scmp.ne.s32.totalorder %s96, %s97
    %p108 = scmp.eq.s32.totalorder %s15, 0
    %p109 = por %p107, %p108
    %p110 = scmp.ne.s32.totalorder %s96, %s97
    %p111 = scmp.eq.s32.totalorder %s16, 1
    %p112 = por %p110, %p111
    %p114 = scmp.ne.s32.totalorder %s97, %s113
    %p115 = scmp.eq.s32.totalorder %s16, 0
    %p116 = por %p114, %p115
    %p117 = scmp.le.s32.totalorder 1, %s10
    %p118 = scmp.lt.s32.totalorder %s10, 3
    %p119 = pnand %p117, %p118
    %p120 = pneg %p119
    // Predicated region
    $region9: #{conv_block.2} parent=5 // pred_check
      _
    $region10: #{conv_block.2} parent=5 // pred_check_branch
      %122 = sbr.rel (%p119) target = $region12
    $region11: #{conv_block.2} parent=5 // pred_region
      %s123 = ssub.s32 %s10, 1
      // Predicated region
      $region13: #{conv_block.2} parent=11 // pred_check
        %p124 = pneg %p57
      $region14: #{conv_block.2} parent=11 // pred_check_branch
        %126 = sbr.rel (%p124) target = $region16
      $region15: #{conv_block.2} parent=11 // pred_region
        _
      $region16: #{conv_block.2} parent=11 // pred_fallthru
        _
    $region12: #{conv_block.2} parent=5 // pred_fallthru
      _
    %p127 = scmp.lt.s32.totalorder %s10, 2
    // Predicated region
    $region17: #{conv_block.2} parent=5 // pred_check
      %p128 = pneg %p127
    $region18: #{conv_block.2} parent=5 // pred_check_branch
      %130 = sbr.rel (%p128) target = $region20
    $region19: #{conv_block.2} parent=5 // pred_region
      // Predicated region
      $region21: #{conv_block.2} parent=19 // pred_check
        %p131 = pneg %p30
      $region22: #{conv_block.2} parent=19 // pred_check_branch
        %133 = sbr.rel (%p131) target = $region24
      $region23: #{conv_block.2} parent=19 // pred_region
        %p134 = scmp.lt.s32.totalorder %s10, 1
        %s135 = scalar_select %p134, %s10, 1
        %s136 = smul.addr %s135, 3
        %s137 = smul.addr %s136, 4
        %s138 = scalar_lea.vmem %s0, %s137
      $region24: #{conv_block.2} parent=19 // pred_fallthru
        _
    $region20: #{conv_block.2} parent=5 // pred_fallthru
      _
    %p139 = scmp.le.s32.totalorder 1, %s10
    %p140 = scmp.lt.s32.totalorder %s10, 3
    %p141 = pnand %p139, %p140
    %p142 = pneg %p141
    // Predicated region
    $region25: #{conv_block.2} parent=5 // pred_check
      _
    $region26: #{conv_block.2} parent=5 // pred_check_branch
      %144 = sbr.rel (%p141) target = $region28
    $region27: #{conv_block.2} parent=5 // pred_region
      %s145 = ssub.s32 %s10, 1
      %p146 = scmp.lt.s32.totalorder %s15, 1
      %s147 = scalar_select %p146, %s15, 1
      %s148 = smul.addr %s147, 3
      %s149 = smul.addr %s148, 4
      %s150 = scalar_lea.vmem %s0, %s149
      %p151 = pneg %p36
      %p152 = pneg %p33
      %p153 = pneg %p57
      %p154 = pneg %p54
      %p155 = pneg %p83
      %p156 = pneg %p80
      %p157 = scmp.lt.s32.totalorder %s15, 1
      %s158 = scalar_select %p157, %s15, 1
      %s159 = smul.addr %s158, 2
      %s160 = smul.addr %s159, 4
      %s161 = scalar_lea.vmem %s2, %s160
      %p162 = pneg %p109
      %p163 = pneg %p106
      %p164 = scmp.lt.s32.totalorder %s15, 1
      %s165 = scalar_select %p164, %s15, 1
      %s166 = smul.addr %s165, 4
      %s167 = scalar_lea.vmem %s3, %s166
      %p168 = scmp.lt.s32.totalorder %s15, 1
      %s169 = scalar_select %p168, %s15, 1
      %s170 = smul.addr %s169, 3
      %s171 = smul.addr %s170, 4
      %s172 = scalar_lea.vmem %s0, %s171
      %p173 = scmp.lt.s32.totalorder %s15, 1
      %s174 = scalar_select %p173, %s15, 1
      %s175 = smul.addr %s174, 2
      %s176 = smul.addr %s175, 4
      %s177 = scalar_lea.vmem %s2, %s176
      %p178 = scmp.lt.s32.totalorder %s15, 1
      %s179 = scalar_select %p178, %s15, 1
      %s180 = smul.addr %s179, 4
      %s181 = scalar_lea.vmem %s3, %s180
      %v182 = vlaneseq
      %v183 = vand.u32 %v182, 127
      %v184 = vadd.s32 %v183, 128
      %vm185 = vcmp.lt.s32.totalorder %v183, 0
      %v186 = vsub.s32 0, %v183
      %v187 = vsel %vm185, %v186, %v183
      %v188 = vshrl.u32 %v187, 4
      %v189 = vand.u32 %v187, 15
      %v190 = vsub.s32 0, %v189
      %v191 = vsel %vm185, %v190, %v189
      %vm192 = vcmp.lt.s32.totalorder %v184, 0
      %v193 = vsub.s32 0, %v184
      %v194 = vsel %vm192, %v193, %v184
      %v195 = vshrl.u32 %v194, 4
      %v196 = vand.u32 %v194, 15
      %v197 = vsub.s32 0, %v196
      %v198 = vsel %vm192, %v197, %v196
      %vm199 = vcmp.ne.s32.totalorder %v191, 0
      %vm200 = vcmp.ne.s32.totalorder %v198, 0
      %vm201 = vcmp.lt.s32.totalorder %v191, 0
      %vm202 = vcmp.lt.s32.totalorder %v198, 0
      %vm203 = vmand %vm201, %vm199
      %vm204 = vmand %vm202, %vm200
      %v205 = vadd.s32 %v191, 16
      %v206 = vadd.s32 %v198, 16
      %v207 = vsel %vm203, %v205, %v191
      %v208 = vsel %vm204, %v206, %v198
      %v209 = vld [vmem:[%s172] sm:$0xff]
      %v210 = vadd.s32 %v207, 4294967295
      %v211 = vadd.s32 %v208, 4294967295
      %vm212 = vcmp.ge.s32.totalorder %v210, 0
      %vm213 = vcmp.ge.s32.totalorder %v211, 0
      %vm214 = vcmp.lt.s32.totalorder %v210, 16
      %vm215 = vcmp.lt.s32.totalorder %v211, 16
      %vm216 = vmand %vm212, %vm214
      %vm217 = vmand %vm213, %vm215
      %v218 = vsel %vm216, 1, 0
      %v219 = vsel %vm217, 1, 0
      %vm220 = vcmp.eq.s32.totalorder %v218, 1
      %vm221 = vcmp.eq.s32.totalorder %v219, 1
      %v223 = vcombine.high %v209, %v209
      %v225 = vsel %vm220, %v209, 0.0
      %v226 = vsel %vm221, %v223, 0.0
      %v227 = vld [vmem:[%s1] sm:$0xf]
      %v228 = vld [vmem:[%s172 + $0x8] sm:$0xf]
      %s229 = scalar_lea.vmem %s1, 4
      %v230 = vld [vmem:[%s229] sm:$0xf]
      %232 = vrot.lane.b32.xlu0 %v209, 127
      %v233 = vpop.permute.xlu0 %232
      %234 = vrot.lane.b32.xlu0 %v223, 127
      %v235 = vpop.permute.xlu0 %234
      %236 = vrot.lane.b32.xlu0 %v228, 127
      %v237 = vpop.permute.xlu0 %236
      %vm238 = vcmask 1039360
      %v239 = vsel %vm238, %v233, %v235
      %v240 = vsel %vm238, %v235, %v237
      %vm241 = vcmask 31744
      %v243 = vsel %vm241, %v230, 0
      %vm245 = vcmask 1043456
      %v246 = vsel %vm245, %v239, 0
      %v248 = vsel %vm245, %v240, 0
      %250 = vmatprep.subr.mxu0 0.0
      %251 = vmatpush1.msra.mxu0 0.0
      %252 = vmatprep.subr.mxu0 0.0
      %253 = vmatpush1.msra.mxu0 0.0
      %254 = vmatprep.subr.mxu0 0.0
      %255 = vmatpush1.msra.mxu0 0.0
      %256 = vmatprep.subr.mxu0 0.0
      %257 = vmatpush1.msra.mxu0 0.0
      %258 = vmatprep.subr.mxu0 0.0
      %259 = vmatpush1.msra.mxu0 0.0
      %260 = vmatprep.subr.mxu0 0.0
      %261 = vmatpush1.msra.mxu0 0.0
      %262 = vmatprep.subr.mxu0 0.0
      %263 = vmatpush1.msra.mxu0 0.0
      %264 = vmatprep.subr.mxu0 0.0
      %265 = vmatpush1.msra.mxu0 0.0
      %266 = vmatprep.subr.mxu0 0.0
      %267 = vmatpush1.msra.mxu0 0.0
      %268 = vmatprep.subr.mxu0 0.0
      %269 = vmatpush1.msra.mxu0 0.0
      %270 = vmatprep.subr.mxu0 0.0
      %271 = vmatpush1.msra.mxu0 0.0
      %272 = vmatprep.subr.mxu0 0.0
      %273 = vmatpush1.msra.mxu0 0.0
      %274 = vmatprep.subr.mxu0 0.0
      %275 = vmatpush1.msra.mxu0 0.0
      %276 = vmatprep.subr.mxu0 0.0
      %277 = vmatpush1.msra.mxu0 0.0
      %278 = vmatprep.subr.mxu0 0.0
      %279 = vmatpush1.msra.mxu0 0.0
      %280 = vmatprep.subr.mxu0 %v248
      %281 = vmatpush1.msra.mxu0 %v246
      %282 = vmatprep.subr.mxu0 0.0
      %283 = vmatpush2.msra.mxu0 0.0
      %284 = vmatprep.subr.mxu0 0.0
      %285 = vmatpush2.msra.mxu0 0.0
      %286 = vmatprep.subr.mxu0 0.0
      %287 = vmatpush2.msra.mxu0 0.0
      %288 = vmatprep.subr.mxu0 0.0
      %289 = vmatpush2.msra.mxu0 0.0
      %290 = vmatprep.subr.mxu0 0.0
      %291 = vmatpush2.msra.mxu0 0.0
      %292 = vmatprep.subr.mxu0 0.0
      %293 = vmatpush2.msra.mxu0 0.0
      %294 = vmatprep.subr.mxu0 0.0
      %295 = vmatpush2.msra.mxu0 0.0
      %296 = vmatprep.subr.mxu0 0.0
      %297 = vmatpush2.msra.mxu0 0.0
      %298 = vmatprep.subr.mxu0 0.0
      %299 = vmatpush2.msra.mxu0 0.0
      %300 = vmatprep.subr.mxu0 0.0
      %301 = vmatpush2.msra.mxu0 0.0
      %302 = vmatprep.subr.mxu0 0.0
      %303 = vmatpush2.msra.mxu0 0.0
      %304 = vmatprep.subr.mxu0 0.0
      %305 = vmatpush2.msra.mxu0 0.0
      %306 = vmatprep.subr.mxu0 0.0
      %307 = vmatpush2.msra.mxu0 0.0
      %308 = vmatprep.subr.mxu0 0.0
      %309 = vmatpush2.msra.mxu0 0.0
      %310 = vmatprep.subr.mxu0 0.0
      %311 = vmatpush2.msra.mxu0 0.0
      %312 = vmatprep.subr.mxu0 0.0
      %313 = vmatpush2.msra.mxu0 0.0
      %314 = vmatprep.mubr.f32.mxu0 0.0
      %315 = vmatmul.mubr.f32.gmra.mxu0 %v243
      %v316 = vpop.f32.mrf.mxu0
      %v317 = vadd.f32 0.0, %v316
      %v318 = vpop.f32.mrf.mxu0
      %v319 = vadd.f32 0.0, %v318
      %320 = vdwg.mxu0
      %v322 = vsel %vm241, %v227, 0
      %v325 = vsel %vm245, %v225, 0
      %v328 = vsel %vm245, %v226, 0
      %330 = vmatprep.subr.mxu0 0.0
      %331 = vmatpush1.msra.mxu0 0.0
      %332 = vmatprep.subr.mxu0 0.0
      %333 = vmatpush1.msra.mxu0 0.0
      %334 = vmatprep.subr.mxu0 0.0
      %335 = vmatpush1.msra.mxu0 0.0
      %336 = vmatprep.subr.mxu0 0.0
      %337 = vmatpush1.msra.mxu0 0.0
      %338 = vmatprep.subr.mxu0 0.0
      %339 = vmatpush1.msra.mxu0 0.0
      %340 = vmatprep.subr.mxu0 0.0
      %341 = vmatpush1.msra.mxu0 0.0
      %342 = vmatprep.subr.mxu0 0.0
      %343 = vmatpush1.msra.mxu0 0.0
      %344 = vmatprep.subr.mxu0 0.0
      %345 = vmatpush1.msra.mxu0 0.0
      %346 = vmatprep.subr.mxu0 0.0
      %347 = vmatpush1.msra.mxu0 0.0
      %348 = vmatprep.subr.mxu0 0.0
      %349 = vmatpush1.msra.mxu0 0.0
      %350 = vmatprep.subr.mxu0 0.0
      %351 = vmatpush1.msra.mxu0 0.0
      %352 = vmatprep.subr.mxu0 0.0
      %353 = vmatpush1.msra.mxu0 0.0
      %354 = vmatprep.subr.mxu0 0.0
      %355 = vmatpush1.msra.mxu0 0.0
      %356 = vmatprep.subr.mxu0 0.0
      %357 = vmatpush1.msra.mxu0 0.0
      %358 = vmatprep.subr.mxu0 0.0
      %359 = vmatpush1.msra.mxu0 0.0
      %360 = vmatprep.subr.mxu0 %v328
      %361 = vmatpush1.msra.mxu0 %v325
      %362 = vmatprep.subr.mxu0 0.0
      %363 = vmatpush2.msra.mxu0 0.0
      %364 = vmatprep.subr.mxu0 0.0
      %365 = vmatpush2.msra.mxu0 0.0
      %366 = vmatprep.subr.mxu0 0.0
      %367 = vmatpush2.msra.mxu0 0.0
      %368 = vmatprep.subr.mxu0 0.0
      %369 = vmatpush2.msra.mxu0 0.0
      %370 = vmatprep.subr.mxu0 0.0
      %371 = vmatpush2.msra.mxu0 0.0
      %372 = vmatprep.subr.mxu0 0.0
      %373 = vmatpush2.msra.mxu0 0.0
      %374 = vmatprep.subr.mxu0 0.0
      %375 = vmatpush2.msra.mxu0 0.0
      %376 = vmatprep.subr.mxu0 0.0
      %377 = vmatpush2.msra.mxu0 0.0
      %378 = vmatprep.subr.mxu0 0.0
      %379 = vmatpush2.msra.mxu0 0.0
      %380 = vmatprep.subr.mxu0 0.0
      %381 = vmatpush2.msra.mxu0 0.0
      %382 = vmatprep.subr.mxu0 0.0
      %383 = vmatpush2.msra.mxu0 0.0
      %384 = vmatprep.subr.mxu0 0.0
      %385 = vmatpush2.msra.mxu0 0.0
      %386 = vmatprep.subr.mxu0 0.0
      %387 = vmatpush2.msra.mxu0 0.0
      %388 = vmatprep.subr.mxu0 0.0
      %389 = vmatpush2.msra.mxu0 0.0
      %390 = vmatprep.subr.mxu0 0.0
      %391 = vmatpush2.msra.mxu0 0.0
      %392 = vmatprep.subr.mxu0 0.0
      %393 = vmatpush2.msra.mxu0 0.0
      %394 = vmatprep.mubr.f32.mxu0 0.0
      %395 = vmatmul.mubr.f32.gmra.mxu0 %v322
      %v396 = vpop.f32.mrf.mxu0
      %v397 = vadd.f32 %v317, %v396
      %v398 = vpop.f32.mrf.mxu0
      %v399 = vadd.f32 %v319, %v398
      %400 = vdwg.mxu0
      %v401 = vld [vmem:[%s172] sm:$0xff]
      %v402 = vld [vmem:[%s172 + $0x8] sm:$0xf]
      %v403 = vadd.s32 %v207, 1
      %v404 = vadd.s32 %v208, 1
      %vm405 = vcmp.ge.s32.totalorder %v403, 0
      %vm406 = vcmp.ge.s32.totalorder %v404, 0
      %vm407 = vcmp.lt.s32.totalorder %v403, 16
      %vm408 = vcmp.lt.s32.totalorder %v404, 16
      %vm409 = vmand %vm405, %vm407
      %vm410 = vmand %vm406, %vm408
      %v411 = vsel %vm409, 1, 0
      %v412 = vsel %vm410, 1, 0
      %vm413 = vcmp.eq.s32.totalorder %v411, 1
      %vm414 = vcmp.eq.s32.totalorder %v412, 1
      %v417 = vcombine.high %v401, %v401
      %418 = vrot.lane.b32.xlu0 %v401, 126
      %v419 = vpop.permute.xlu0 %418
      %420 = vrot.lane.b32.xlu0 %v417, 126
      %v421 = vpop.permute.xlu0 %420
      %422 = vrot.lane.b32.xlu0 %v402, 126
      %v423 = vpop.permute.xlu0 %422
      %vm424 = vcmask 1031168
      %v425 = vsel %vm424, %v419, %v421
      %v426 = vsel %vm424, %v421, %v423
      %v429 = vsel %vm413, %v425, 0.0
      %v430 = vsel %vm414, %v426, 0.0
      %s431 = scalar_lea.vmem %s1, 8
      %v432 = vld [vmem:[%s431] sm:$0xf]
      %v434 = vsel %vm241, %v432, 0
      %v437 = vsel %vm245, %v429, 0
      %v440 = vsel %vm245, %v430, 0
      %442 = vmatprep.subr.mxu0 0.0
      %443 = vmatpush1.msra.mxu0 0.0
      %444 = vmatprep.subr.mxu0 0.0
      %445 = vmatpush1.msra.mxu0 0.0
      %446 = vmatprep.subr.mxu0 0.0
      %447 = vmatpush1.msra.mxu0 0.0
      %448 = vmatprep.subr.mxu0 0.0
      %449 = vmatpush1.msra.mxu0 0.0
      %450 = vmatprep.subr.mxu0 0.0
      %451 = vmatpush1.msra.mxu0 0.0
      %452 = vmatprep.subr.mxu0 0.0
      %453 = vmatpush1.msra.mxu0 0.0
      %454 = vmatprep.subr.mxu0 0.0
      %455 = vmatpush1.msra.mxu0 0.0
      %456 = vmatprep.subr.mxu0 0.0
      %457 = vmatpush1.msra.mxu0 0.0
      %458 = vmatprep.subr.mxu0 0.0
      %459 = vmatpush1.msra.mxu0 0.0
      %460 = vmatprep.subr.mxu0 0.0
      %461 = vmatpush1.msra.mxu0 0.0
      %462 = vmatprep.subr.mxu0 0.0
      %463 = vmatpush1.msra.mxu0 0.0
      %464 = vmatprep.subr.mxu0 0.0
      %465 = vmatpush1.msra.mxu0 0.0
      %466 = vmatprep.subr.mxu0 0.0
      %467 = vmatpush1.msra.mxu0 0.0
      %468 = vmatprep.subr.mxu0 0.0
      %469 = vmatpush1.msra.mxu0 0.0
      %470 = vmatprep.subr.mxu0 0.0
      %471 = vmatpush1.msra.mxu0 0.0
      %472 = vmatprep.subr.mxu0 %v440
      %473 = vmatpush1.msra.mxu0 %v437
      %474 = vmatprep.subr.mxu0 0.0
      %475 = vmatpush2.msra.mxu0 0.0
      %476 = vmatprep.subr.mxu0 0.0
      %477 = vmatpush2.msra.mxu0 0.0
      %478 = vmatprep.subr.mxu0 0.0
      %479 = vmatpush2.msra.mxu0 0.0
      %480 = vmatprep.subr.mxu0 0.0
      %481 = vmatpush2.msra.mxu0 0.0
      %482 = vmatprep.subr.mxu0 0.0
      %483 = vmatpush2.msra.mxu0 0.0
      %484 = vmatprep.subr.mxu0 0.0
      %485 = vmatpush2.msra.mxu0 0.0
      %486 = vmatprep.subr.mxu0 0.0
      %487 = vmatpush2.msra.mxu0 0.0
      %488 = vmatprep.subr.mxu0 0.0
      %489 = vmatpush2.msra.mxu0 0.0
      %490 = vmatprep.subr.mxu0 0.0
      %491 = vmatpush2.msra.mxu0 0.0
      %492 = vmatprep.subr.mxu0 0.0
      %493 = vmatpush2.msra.mxu0 0.0
      %494 = vmatprep.subr.mxu0 0.0
      %495 = vmatpush2.msra.mxu0 0.0
      %496 = vmatprep.subr.mxu0 0.0
      %497 = vmatpush2.msra.mxu0 0.0
      %498 = vmatprep.subr.mxu0 0.0
      %499 = vmatpush2.msra.mxu0 0.0
      %500 = vmatprep.subr.mxu0 0.0
      %501 = vmatpush2.msra.mxu0 0.0
      %502 = vmatprep.subr.mxu0 0.0
      %503 = vmatpush2.msra.mxu0 0.0
      %504 = vmatprep.subr.mxu0 0.0
      %505 = vmatpush2.msra.mxu0 0.0
      %506 = vmatprep.mubr.f32.mxu0 0.0
      %507 = vmatmul.mubr.f32.gmra.mxu0 %v434
      %v508 = vpop.f32.mrf.mxu0
      %v509 = vadd.f32 0.0, %v508
      %v510 = vpop.f32.mrf.mxu0
      %v511 = vadd.f32 0.0, %v510
      %512 = vdwg.mxu0
      %v513 = vadd.f32 %v397, %v509
      %v514 = vadd.f32 %v399, %v511
      %v515 = vld [vmem:[%s172] sm:$0xff]
      %v516 = vld [vmem:[%s172 + $0x8] sm:$0xf]
      %v519 = vcombine.high %v515, %v515
      %520 = vrot.lane.b32.xlu0 %v515, 112
      %v521 = vpop.permute.xlu0 %520
      %522 = vrot.lane.b32.xlu0 %v519, 112
      %v523 = vpop.permute.xlu0 %522
      %524 = vrot.lane.b32.xlu0 %v516, 112
      %v525 = vpop.permute.xlu0 %524
      %vm526 = vcmask 916480
      %v527 = vsel %vm526, %v521, %v523
      %v528 = vsel %vm526, %v523, %v525
      %v531 = vsel %vm220, %v527, 0.0
      %v532 = vsel %vm221, %v528, 0.0
      %s533 = scalar_lea.vmem %s1, 12
      %v534 = vld [vmem:[%s533] sm:$0xf]
      %v536 = vsel %vm241, %v534, 0
      %v539 = vsel %vm245, %v531, 0
      %v542 = vsel %vm245, %v532, 0
      %544 = vmatprep.subr.mxu0 0.0
      %545 = vmatpush1.msra.mxu0 0.0
      %546 = vmatprep.subr.mxu0 0.0
      %547 = vmatpush1.msra.mxu0 0.0
      %548 = vmatprep.subr.mxu0 0.0
      %549 = vmatpush1.msra.mxu0 0.0
      %550 = vmatprep.subr.mxu0 0.0
      %551 = vmatpush1.msra.mxu0 0.0
      %552 = vmatprep.subr.mxu0 0.0
      %553 = vmatpush1.msra.mxu0 0.0
      %554 = vmatprep.subr.mxu0 0.0
      %555 = vmatpush1.msra.mxu0 0.0
      %556 = vmatprep.subr.mxu0 0.0
      %557 = vmatpush1.msra.mxu0 0.0
      %558 = vmatprep.subr.mxu0 0.0
      %559 = vmatpush1.msra.mxu0 0.0
      %560 = vmatprep.subr.mxu0 0.0
      %561 = vmatpush1.msra.mxu0 0.0
      %562 = vmatprep.subr.mxu0 0.0
      %563 = vmatpush1.msra.mxu0 0.0
      %564 = vmatprep.subr.mxu0 0.0
      %565 = vmatpush1.msra.mxu0 0.0
      %566 = vmatprep.subr.mxu0 0.0
      %567 = vmatpush1.msra.mxu0 0.0
      %568 = vmatprep.subr.mxu0 0.0
      %569 = vmatpush1.msra.mxu0 0.0
      %570 = vmatprep.subr.mxu0 0.0
      %571 = vmatpush1.msra.mxu0 0.0
      %572 = vmatprep.subr.mxu0 0.0
      %573 = vmatpush1.msra.mxu0 0.0
      %574 = vmatprep.subr.mxu0 %v542
      %575 = vmatpush1.msra.mxu0 %v539
      %576 = vmatprep.subr.mxu0 0.0
      %577 = vmatpush2.msra.mxu0 0.0
      %578 = vmatprep.subr.mxu0 0.0
      %579 = vmatpush2.msra.mxu0 0.0
      %580 = vmatprep.subr.mxu0 0.0
      %581 = vmatpush2.msra.mxu0 0.0
      %582 = vmatprep.subr.mxu0 0.0
      %583 = vmatpush2.msra.mxu0 0.0
      %584 = vmatprep.subr.mxu0 0.0
      %585 = vmatpush2.msra.mxu0 0.0
      %586 = vmatprep.subr.mxu0 0.0
      %587 = vmatpush2.msra.mxu0 0.0
      %588 = vmatprep.subr.mxu0 0.0
      %589 = vmatpush2.msra.mxu0 0.0
      %590 = vmatprep.subr.mxu0 0.0
      %591 = vmatpush2.msra.mxu0 0.0
      %592 = vmatprep.subr.mxu0 0.0
      %593 = vmatpush2.msra.mxu0 0.0
      %594 = vmatprep.subr.mxu0 0.0
      %595 = vmatpush2.msra.mxu0 0.0
      %596 = vmatprep.subr.mxu0 0.0
      %597 = vmatpush2.msra.mxu0 0.0
      %598 = vmatprep.subr.mxu0 0.0
      %599 = vmatpush2.msra.mxu0 0.0
      %600 = vmatprep.subr.mxu0 0.0
      %601 = vmatpush2.msra.mxu0 0.0
      %602 = vmatprep.subr.mxu0 0.0
      %603 = vmatpush2.msra.mxu0 0.0
      %604 = vmatprep.subr.mxu0 0.0
      %605 = vmatpush2.msra.mxu0 0.0
      %606 = vmatprep.subr.mxu0 0.0
      %607 = vmatpush2.msra.mxu0 0.0
      %608 = vmatprep.mubr.f32.mxu0 0.0
      %609 = vmatmul.mubr.f32.gmra.mxu0 %v536
      %v610 = vpop.f32.mrf.mxu0
      %v611 = vadd.f32 0.0, %v610
      %v612 = vpop.f32.mrf.mxu0
      %v613 = vadd.f32 0.0, %v612
      %614 = vdwg.mxu0
      %v615 = vadd.f32 %v513, %v611
      %v616 = vadd.f32 %v514, %v613
      %v617 = vld [vmem:[%s172] sm:$0xff]
      %v618 = vld [vmem:[%s172 + $0x8] sm:$0xf]
      %s619 = scalar_lea.vmem %s1, 16
      %v620 = vld [vmem:[%s619] sm:$0xf]
      %v623 = vcombine.high %v617, %v617
      %624 = vrot.lane.b32.xlu0 %v617, 111
      %v625 = vpop.permute.xlu0 %624
      %626 = vrot.lane.b32.xlu0 %v623, 111
      %v627 = vpop.permute.xlu0 %626
      %628 = vrot.lane.b32.xlu0 %v618, 111
      %v629 = vpop.permute.xlu0 %628
      %vm630 = vcmask 908288
      %v631 = vsel %vm630, %v625, %v627
      %v632 = vsel %vm630, %v627, %v629
      %v634 = vsel %vm241, %v620, 0
      %v636 = vsel %vm245, %v631, 0
      %v638 = vsel %vm245, %v632, 0
      %640 = vmatprep.subr.mxu0 0.0
      %641 = vmatpush1.msra.mxu0 0.0
      %642 = vmatprep.subr.mxu0 0.0
      %643 = vmatpush1.msra.mxu0 0.0
      %644 = vmatprep.subr.mxu0 0.0
      %645 = vmatpush1.msra.mxu0 0.0
      %646 = vmatprep.subr.mxu0 0.0
      %647 = vmatpush1.msra.mxu0 0.0
      %648 = vmatprep.subr.mxu0 0.0
      %649 = vmatpush1.msra.mxu0 0.0
      %650 = vmatprep.subr.mxu0 0.0
      %651 = vmatpush1.msra.mxu0 0.0
      %652 = vmatprep.subr.mxu0 0.0
      %653 = vmatpush1.msra.mxu0 0.0
      %654 = vmatprep.subr.mxu0 0.0
      %655 = vmatpush1.msra.mxu0 0.0
      %656 = vmatprep.subr.mxu0 0.0
      %657 = vmatpush1.msra.mxu0 0.0
      %658 = vmatprep.subr.mxu0 0.0
      %659 = vmatpush1.msra.mxu0 0.0
      %660 = vmatprep.subr.mxu0 0.0
      %661 = vmatpush1.msra.mxu0 0.0
      %662 = vmatprep.subr.mxu0 0.0
      %663 = vmatpush1.msra.mxu0 0.0
      %664 = vmatprep.subr.mxu0 0.0
      %665 = vmatpush1.msra.mxu0 0.0
      %666 = vmatprep.subr.mxu0 0.0
      %667 = vmatpush1.msra.mxu0 0.0
      %668 = vmatprep.subr.mxu0 0.0
      %669 = vmatpush1.msra.mxu0 0.0
      %670 = vmatprep.subr.mxu0 %v638
      %671 = vmatpush1.msra.mxu0 %v636
      %672 = vmatprep.subr.mxu0 0.0
      %673 = vmatpush2.msra.mxu0 0.0
      %674 = vmatprep.subr.mxu0 0.0
      %675 = vmatpush2.msra.mxu0 0.0
      %676 = vmatprep.subr.mxu0 0.0
      %677 = vmatpush2.msra.mxu0 0.0
      %678 = vmatprep.subr.mxu0 0.0
      %679 = vmatpush2.msra.mxu0 0.0
      %680 = vmatprep.subr.mxu0 0.0
      %681 = vmatpush2.msra.mxu0 0.0
      %682 = vmatprep.subr.mxu0 0.0
      %683 = vmatpush2.msra.mxu0 0.0
      %684 = vmatprep.subr.mxu0 0.0
      %685 = vmatpush2.msra.mxu0 0.0
      %686 = vmatprep.subr.mxu0 0.0
      %687 = vmatpush2.msra.mxu0 0.0
      %688 = vmatprep.subr.mxu0 0.0
      %689 = vmatpush2.msra.mxu0 0.0
      %690 = vmatprep.subr.mxu0 0.0
      %691 = vmatpush2.msra.mxu0 0.0
      %692 = vmatprep.subr.mxu0 0.0
      %693 = vmatpush2.msra.mxu0 0.0
      %694 = vmatprep.subr.mxu0 0.0
      %695 = vmatpush2.msra.mxu0 0.0
      %696 = vmatprep.subr.mxu0 0.0
      %697 = vmatpush2.msra.mxu0 0.0
      %698 = vmatprep.subr.mxu0 0.0
      %699 = vmatpush2.msra.mxu0 0.0
      %700 = vmatprep.subr.mxu0 0.0
      %701 = vmatpush2.msra.mxu0 0.0
      %702 = vmatprep.subr.mxu0 0.0
      %703 = vmatpush2.msra.mxu0 0.0
      %704 = vmatprep.mubr.f32.mxu0 0.0
      %705 = vmatmul.mubr.f32.gmra.mxu0 %v634
      %v706 = vpop.f32.mrf.mxu0
      %v707 = vadd.f32 0.0, %v706
      %v708 = vpop.f32.mrf.mxu0
      %v709 = vadd.f32 0.0, %v708
      %710 = vdwg.mxu0
      %v711 = vadd.f32 %v615, %v707
      %v712 = vadd.f32 %v616, %v709
      %v713 = vld [vmem:[%s172] sm:$0xff]
      %v714 = vld [vmem:[%s172 + $0x8] sm:$0xf]
      %v717 = vcombine.high %v713, %v713
      %718 = vrot.lane.b32.xlu0 %v713, 110
      %v719 = vpop.permute.xlu0 %718
      %720 = vrot.lane.b32.xlu0 %v717, 110
      %v721 = vpop.permute.xlu0 %720
      %722 = vrot.lane.b32.xlu0 %v714, 110
      %v723 = vpop.permute.xlu0 %722
      %vm724 = vcmask 900096
      %v725 = vsel %vm724, %v719, %v721
      %v726 = vsel %vm724, %v721, %v723
      %v729 = vsel %vm413, %v725, 0.0
      %v730 = vsel %vm414, %v726, 0.0
      %s731 = scalar_lea.vmem %s1, 20
      %v732 = vld [vmem:[%s731] sm:$0xf]
      %v734 = vsel %vm241, %v732, 0
      %v737 = vsel %vm245, %v729, 0
      %v740 = vsel %vm245, %v730, 0
      %742 = vmatprep.subr.mxu0 0.0
      %743 = vmatpush1.msra.mxu0 0.0
      %744 = vmatprep.subr.mxu0 0.0
      %745 = vmatpush1.msra.mxu0 0.0
      %746 = vmatprep.subr.mxu0 0.0
      %747 = vmatpush1.msra.mxu0 0.0
      %748 = vmatprep.subr.mxu0 0.0
      %749 = vmatpush1.msra.mxu0 0.0
      %750 = vmatprep.subr.mxu0 0.0
      %751 = vmatpush1.msra.mxu0 0.0
      %752 = vmatprep.subr.mxu0 0.0
      %753 = vmatpush1.msra.mxu0 0.0
      %754 = vmatprep.subr.mxu0 0.0
      %755 = vmatpush1.msra.mxu0 0.0
      %756 = vmatprep.subr.mxu0 0.0
      %757 = vmatpush1.msra.mxu0 0.0
      %758 = vmatprep.subr.mxu0 0.0
      %759 = vmatpush1.msra.mxu0 0.0
      %760 = vmatprep.subr.mxu0 0.0
      %761 = vmatpush1.msra.mxu0 0.0
      %762 = vmatprep.subr.mxu0 0.0
      %763 = vmatpush1.msra.mxu0 0.0
      %764 = vmatprep.subr.mxu0 0.0
      %765 = vmatpush1.msra.mxu0 0.0
      %766 = vmatprep.subr.mxu0 0.0
      %767 = vmatpush1.msra.mxu0 0.0
      %768 = vmatprep.subr.mxu0 0.0
      %769 = vmatpush1.msra.mxu0 0.0
      %770 = vmatprep.subr.mxu0 0.0
      %771 = vmatpush1.msra.mxu0 0.0
      %772 = vmatprep.subr.mxu0 %v740
      %773 = vmatpush1.msra.mxu0 %v737
      %774 = vmatprep.subr.mxu0 0.0
      %775 = vmatpush2.msra.mxu0 0.0
      %776 = vmatprep.subr.mxu0 0.0
      %777 = vmatpush2.msra.mxu0 0.0
      %778 = vmatprep.subr.mxu0 0.0
      %779 = vmatpush2.msra.mxu0 0.0
      %780 = vmatprep.subr.mxu0 0.0
      %781 = vmatpush2.msra.mxu0 0.0
      %782 = vmatprep.subr.mxu0 0.0
      %783 = vmatpush2.msra.mxu0 0.0
      %784 = vmatprep.subr.mxu0 0.0
      %785 = vmatpush2.msra.mxu0 0.0
      %786 = vmatprep.subr.mxu0 0.0
      %787 = vmatpush2.msra.mxu0 0.0
      %788 = vmatprep.subr.mxu0 0.0
      %789 = vmatpush2.msra.mxu0 0.0
      %790 = vmatprep.subr.mxu0 0.0
      %791 = vmatpush2.msra.mxu0 0.0
      %792 = vmatprep.subr.mxu0 0.0
      %793 = vmatpush2.msra.mxu0 0.0
      %794 = vmatprep.subr.mxu0 0.0
      %795 = vmatpush2.msra.mxu0 0.0
      %796 = vmatprep.subr.mxu0 0.0
      %797 = vmatpush2.msra.mxu0 0.0
      %798 = vmatprep.subr.mxu0 0.0
      %799 = vmatpush2.msra.mxu0 0.0
      %800 = vmatprep.subr.mxu0 0.0
      %801 = vmatpush2.msra.mxu0 0.0
      %802 = vmatprep.subr.mxu0 0.0
      %803 = vmatpush2.msra.mxu0 0.0
      %804 = vmatprep.subr.mxu0 0.0
      %805 = vmatpush2.msra.mxu0 0.0
      %806 = vmatprep.mubr.f32.mxu0 0.0
      %807 = vmatmul.mubr.f32.gmra.mxu0 %v734
      %v808 = vpop.f32.mrf.mxu0
      %v809 = vadd.f32 0.0, %v808
      %v810 = vpop.f32.mrf.mxu0
      %v811 = vadd.f32 0.0, %v810
      %812 = vdwg.mxu0
      %v813 = vadd.f32 %v711, %v809
      %v814 = vadd.f32 %v712, %v811
      %v815 = vld [vmem:[%s172] sm:$0xff]
      %v816 = vld [vmem:[%s172 + $0x8] sm:$0xf]
      %v819 = vcombine.high %v815, %v815
      %820 = vrot.lane.b32.xlu0 %v815, 96
      %v821 = vpop.permute.xlu0 %820
      %822 = vrot.lane.b32.xlu0 %v819, 96
      %v823 = vpop.permute.xlu0 %822
      %824 = vrot.lane.b32.xlu0 %v816, 96
      %v825 = vpop.permute.xlu0 %824
      %vm826 = vcmask 785408
      %v827 = vsel %vm826, %v821, %v823
      %v828 = vsel %vm826, %v823, %v825
      %v831 = vsel %vm220, %v827, 0.0
      %v832 = vsel %vm221, %v828, 0.0
      %s833 = scalar_lea.vmem %s1, 24
      %v834 = vld [vmem:[%s833] sm:$0xf]
      %v836 = vsel %vm241, %v834, 0
      %v839 = vsel %vm245, %v831, 0
      %v842 = vsel %vm245, %v832, 0
      %844 = vmatprep.subr.mxu0 0.0
      %845 = vmatpush1.msra.mxu0 0.0
      %846 = vmatprep.subr.mxu0 0.0
      %847 = vmatpush1.msra.mxu0 0.0
      %848 = vmatprep.subr.mxu0 0.0
      %849 = vmatpush1.msra.mxu0 0.0
      %850 = vmatprep.subr.mxu0 0.0
      %851 = vmatpush1.msra.mxu0 0.0
      %852 = vmatprep.subr.mxu0 0.0
      %853 = vmatpush1.msra.mxu0 0.0
      %854 = vmatprep.subr.mxu0 0.0
      %855 = vmatpush1.msra.mxu0 0.0
      %856 = vmatprep.subr.mxu0 0.0
      %857 = vmatpush1.msra.mxu0 0.0
      %858 = vmatprep.subr.mxu0 0.0
      %859 = vmatpush1.msra.mxu0 0.0
      %860 = vmatprep.subr.mxu0 0.0
      %861 = vmatpush1.msra.mxu0 0.0
      %862 = vmatprep.subr.mxu0 0.0
      %863 = vmatpush1.msra.mxu0 0.0
      %864 = vmatprep.subr.mxu0 0.0
      %865 = vmatpush1.msra.mxu0 0.0
      %866 = vmatprep.subr.mxu0 0.0
      %867 = vmatpush1.msra.mxu0 0.0
      %868 = vmatprep.subr.mxu0 0.0
      %869 = vmatpush1.msra.mxu0 0.0
      %870 = vmatprep.subr.mxu0 0.0
      %871 = vmatpush1.msra.mxu0 0.0
      %872 = vmatprep.subr.mxu0 0.0
      %873 = vmatpush1.msra.mxu0 0.0
      %874 = vmatprep.subr.mxu0 %v842
      %875 = vmatpush1.msra.mxu0 %v839
      %876 = vmatprep.subr.mxu0 0.0
      %877 = vmatpush2.msra.mxu0 0.0
      %878 = vmatprep.subr.mxu0 0.0
      %879 = vmatpush2.msra.mxu0 0.0
      %880 = vmatprep.subr.mxu0 0.0
      %881 = vmatpush2.msra.mxu0 0.0
      %882 = vmatprep.subr.mxu0 0.0
      %883 = vmatpush2.msra.mxu0 0.0
      %884 = vmatprep.subr.mxu0 0.0
      %885 = vmatpush2.msra.mxu0 0.0
      %886 = vmatprep.subr.mxu0 0.0
      %887 = vmatpush2.msra.mxu0 0.0
      %888 = vmatprep.subr.mxu0 0.0
      %889 = vmatpush2.msra.mxu0 0.0
      %890 = vmatprep.subr.mxu0 0.0
      %891 = vmatpush2.msra.mxu0 0.0
      %892 = vmatprep.subr.mxu0 0.0
      %893 = vmatpush2.msra.mxu0 0.0
      %894 = vmatprep.subr.mxu0 0.0
      %895 = vmatpush2.msra.mxu0 0.0
      %896 = vmatprep.subr.mxu0 0.0
      %897 = vmatpush2.msra.mxu0 0.0
      %898 = vmatprep.subr.mxu0 0.0
      %899 = vmatpush2.msra.mxu0 0.0
      %900 = vmatprep.subr.mxu0 0.0
      %901 = vmatpush2.msra.mxu0 0.0
      %902 = vmatprep.subr.mxu0 0.0
      %903 = vmatpush2.msra.mxu0 0.0
      %904 = vmatprep.subr.mxu0 0.0
      %905 = vmatpush2.msra.mxu0 0.0
      %906 = vmatprep.subr.mxu0 0.0
      %907 = vmatpush2.msra.mxu0 0.0
      %908 = vmatprep.mubr.f32.mxu0 0.0
      %909 = vmatmul.mubr.f32.gmra.mxu0 %v836
      %v910 = vpop.f32.mrf.mxu0
      %v911 = vadd.f32 0.0, %v910
      %v912 = vpop.f32.mrf.mxu0
      %v913 = vadd.f32 0.0, %v912
      %914 = vdwg.mxu0
      %v915 = vadd.f32 %v813, %v911
      %v916 = vadd.f32 %v814, %v913
      %v917 = vld [vmem:[%s172] sm:$0xff]
      %v918 = vld [vmem:[%s172 + $0x8] sm:$0xf]
      %s919 = scalar_lea.vmem %s1, 28
      %v920 = vld [vmem:[%s919] sm:$0xf]
      %v923 = vcombine.high %v917, %v917
      %924 = vrot.lane.b32.xlu0 %v917, 95
      %v925 = vpop.permute.xlu0 %924
      %926 = vrot.lane.b32.xlu0 %v923, 95
      %v927 = vpop.permute.xlu0 %926
      %928 = vrot.lane.b32.xlu0 %v918, 95
      %v929 = vpop.permute.xlu0 %928
      %vm930 = vcmask 777216
      %v931 = vsel %vm930, %v925, %v927
      %v932 = vsel %vm930, %v927, %v929
      %v934 = vsel %vm241, %v920, 0
      %v936 = vsel %vm245, %v931, 0
      %v938 = vsel %vm245, %v932, 0
      %940 = vmatprep.subr.mxu0 0.0
      %941 = vmatpush1.msra.mxu0 0.0
      %942 = vmatprep.subr.mxu0 0.0
      %943 = vmatpush1.msra.mxu0 0.0
      %944 = vmatprep.subr.mxu0 0.0
      %945 = vmatpush1.msra.mxu0 0.0
      %946 = vmatprep.subr.mxu0 0.0
      %947 = vmatpush1.msra.mxu0 0.0
      %948 = vmatprep.subr.mxu0 0.0
      %949 = vmatpush1.msra.mxu0 0.0
      %950 = vmatprep.subr.mxu0 0.0
      %951 = vmatpush1.msra.mxu0 0.0
      %952 = vmatprep.subr.mxu0 0.0
      %953 = vmatpush1.msra.mxu0 0.0
      %954 = vmatprep.subr.mxu0 0.0
      %955 = vmatpush1.msra.mxu0 0.0
      %956 = vmatprep.subr.mxu0 0.0
      %957 = vmatpush1.msra.mxu0 0.0
      %958 = vmatprep.subr.mxu0 0.0
      %959 = vmatpush1.msra.mxu0 0.0
      %960 = vmatprep.subr.mxu0 0.0
      %961 = vmatpush1.msra.mxu0 0.0
      %962 = vmatprep.subr.mxu0 0.0
      %963 = vmatpush1.msra.mxu0 0.0
      %964 = vmatprep.subr.mxu0 0.0
      %965 = vmatpush1.msra.mxu0 0.0
      %966 = vmatprep.subr.mxu0 0.0
      %967 = vmatpush1.msra.mxu0 0.0
      %968 = vmatprep.subr.mxu0 0.0
      %969 = vmatpush1.msra.mxu0 0.0
      %970 = vmatprep.subr.mxu0 %v938
      %971 = vmatpush1.msra.mxu0 %v936
      %972 = vmatprep.subr.mxu0 0.0
      %973 = vmatpush2.msra.mxu0 0.0
      %974 = vmatprep.subr.mxu0 0.0
      %975 = vmatpush2.msra.mxu0 0.0
      %976 = vmatprep.subr.mxu0 0.0
      %977 = vmatpush2.msra.mxu0 0.0
      %978 = vmatprep.subr.mxu0 0.0
      %979 = vmatpush2.msra.mxu0 0.0
      %980 = vmatprep.subr.mxu0 0.0
      %981 = vmatpush2.msra.mxu0 0.0
      %982 = vmatprep.subr.mxu0 0.0
      %983 = vmatpush2.msra.mxu0 0.0
      %984 = vmatprep.subr.mxu0 0.0
      %985 = vmatpush2.msra.mxu0 0.0
      %986 = vmatprep.subr.mxu0 0.0
      %987 = vmatpush2.msra.mxu0 0.0
      %988 = vmatprep.subr.mxu0 0.0
      %989 = vmatpush2.msra.mxu0 0.0
      %990 = vmatprep.subr.mxu0 0.0
      %991 = vmatpush2.msra.mxu0 0.0
      %992 = vmatprep.subr.mxu0 0.0
      %993 = vmatpush2.msra.mxu0 0.0
      %994 = vmatprep.subr.mxu0 0.0
      %995 = vmatpush2.msra.mxu0 0.0
      %996 = vmatprep.subr.mxu0 0.0
      %997 = vmatpush2.msra.mxu0 0.0
      %998 = vmatprep.subr.mxu0 0.0
      %999 = vmatpush2.msra.mxu0 0.0
      %1000 = vmatprep.subr.mxu0 0.0
      %1001 = vmatpush2.msra.mxu0 0.0
      %1002 = vmatprep.subr.mxu0 0.0
      %1003 = vmatpush2.msra.mxu0 0.0
      %1004 = vmatprep.mubr.f32.mxu0 0.0
      %1005 = vmatmul.mubr.f32.gmra.mxu0 %v934
      %v1006 = vpop.f32.mrf.mxu0
      %v1007 = vadd.f32 0.0, %v1006
      %v1008 = vpop.f32.mrf.mxu0
      %v1009 = vadd.f32 0.0, %v1008
      %1010 = vdwg.mxu0
      %v1011 = vadd.f32 %v915, %v1007
      %v1012 = vadd.f32 %v916, %v1009
      %v1013 = vld [vmem:[%s172] sm:$0xff]
      %v1014 = vld [vmem:[%s172 + $0x8] sm:$0xf]
      %v1017 = vcombine.high %v1013, %v1013
      %1018 = vrot.lane.b32.xlu0 %v1013, 94
      %v1019 = vpop.permute.xlu0 %1018
      %1020 = vrot.lane.b32.xlu0 %v1017, 94
      %v1021 = vpop.permute.xlu0 %1020
      %1022 = vrot.lane.b32.xlu0 %v1014, 94
      %v1023 = vpop.permute.xlu0 %1022
      %vm1024 = vcmask 769024
      %v1025 = vsel %vm1024, %v1019, %v1021
      %v1026 = vsel %vm1024, %v1021, %v1023
      %v1029 = vsel %vm413, %v1025, 0.0
      %v1030 = vsel %vm414, %v1026, 0.0
      %s1031 = scalar_lea.vmem %s1, 32
      %v1032 = vld [vmem:[%s1031] sm:$0xf]
      %v1034 = vsel %vm241, %v1032, 0
      %v1037 = vsel %vm245, %v1029, 0
      %v1040 = vsel %vm245, %v1030, 0
      %1042 = vmatprep.subr.mxu0 0.0
      %1043 = vmatpush1.msra.mxu0 0.0
      %1044 = vmatprep.subr.mxu0 0.0
      %1045 = vmatpush1.msra.mxu0 0.0
      %1046 = vmatprep.subr.mxu0 0.0
      %1047 = vmatpush1.msra.mxu0 0.0
      %1048 = vmatprep.subr.mxu0 0.0
      %1049 = vmatpush1.msra.mxu0 0.0
      %1050 = vmatprep.subr.mxu0 0.0
      %1051 = vmatpush1.msra.mxu0 0.0
      %1052 = vmatprep.subr.mxu0 0.0
      %1053 = vmatpush1.msra.mxu0 0.0
      %1054 = vmatprep.subr.mxu0 0.0
      %1055 = vmatpush1.msra.mxu0 0.0
      %1056 = vmatprep.subr.mxu0 0.0
      %1057 = vmatpush1.msra.mxu0 0.0
      %1058 = vmatprep.subr.mxu0 0.0
      %1059 = vmatpush1.msra.mxu0 0.0
      %1060 = vmatprep.subr.mxu0 0.0
      %1061 = vmatpush1.msra.mxu0 0.0
      %1062 = vmatprep.subr.mxu0 0.0
      %1063 = vmatpush1.msra.mxu0 0.0
      %1064 = vmatprep.subr.mxu0 0.0
      %1065 = vmatpush1.msra.mxu0 0.0
      %1066 = vmatprep.subr.mxu0 0.0
      %1067 = vmatpush1.msra.mxu0 0.0
      %1068 = vmatprep.subr.mxu0 0.0
      %1069 = vmatpush1.msra.mxu0 0.0
      %1070 = vmatprep.subr.mxu0 0.0
      %1071 = vmatpush1.msra.mxu0 0.0
      %1072 = vmatprep.subr.mxu0 %v1040
      %1073 = vmatpush1.msra.mxu0 %v1037
      %1074 = vmatprep.subr.mxu0 0.0
      %1075 = vmatpush2.msra.mxu0 0.0
      %1076 = vmatprep.subr.mxu0 0.0
      %1077 = vmatpush2.msra.mxu0 0.0
      %1078 = vmatprep.subr.mxu0 0.0
      %1079 = vmatpush2.msra.mxu0 0.0
      %1080 = vmatprep.subr.mxu0 0.0
      %1081 = vmatpush2.msra.mxu0 0.0
      %1082 = vmatprep.subr.mxu0 0.0
      %1083 = vmatpush2.msra.mxu0 0.0
      %1084 = vmatprep.subr.mxu0 0.0
      %1085 = vmatpush2.msra.mxu0 0.0
      %1086 = vmatprep.subr.mxu0 0.0
      %1087 = vmatpush2.msra.mxu0 0.0
      %1088 = vmatprep.subr.mxu0 0.0
      %1089 = vmatpush2.msra.mxu0 0.0
      %1090 = vmatprep.subr.mxu0 0.0
      %1091 = vmatpush2.msra.mxu0 0.0
      %1092 = vmatprep.subr.mxu0 0.0
      %1093 = vmatpush2.msra.mxu0 0.0
      %1094 = vmatprep.subr.mxu0 0.0
      %1095 = vmatpush2.msra.mxu0 0.0
      %1096 = vmatprep.subr.mxu0 0.0
      %1097 = vmatpush2.msra.mxu0 0.0
      %1098 = vmatprep.subr.mxu0 0.0
      %1099 = vmatpush2.msra.mxu0 0.0
      %1100 = vmatprep.subr.mxu0 0.0
      %1101 = vmatpush2.msra.mxu0 0.0
      %1102 = vmatprep.subr.mxu0 0.0
      %1103 = vmatpush2.msra.mxu0 0.0
      %1104 = vmatprep.subr.mxu0 0.0
      %1105 = vmatpush2.msra.mxu0 0.0
      %1106 = vmatprep.mubr.f32.mxu0 0.0
      %1107 = vmatmul.mubr.f32.gmra.mxu0 %v1034
      %v1108 = vpop.f32.mrf.mxu0
      %v1109 = vadd.f32 0.0, %v1108
      %v1110 = vpop.f32.mrf.mxu0
      %v1111 = vadd.f32 0.0, %v1110
      %1112 = vdwg.mxu0
      %v1113 = vadd.f32 %v1011, %v1109
      %v1114 = vadd.f32 %v1012, %v1111
      %v1117 = vcombine.low %v1113, %v1114
      %1119 = vst [vmem:[%s177] sm:$0xff] %v1117
      %v1120 = vsel %vm245, %v1113, 0.0
      %v1121 = vsel %vm245, %v1114, 0.0
      %v1122 = vadd.f32 %v1120, %v1121
      %1123 = vadd.xlane.f32.xlu0 %v1122
      %v1124 = vpop.xlane.xlu0 %1123
      %vm1125 = vcmask 3072
      %1126 = vst.msk [vmem:[%s181] sm:$0xf] %vm1125, %v1124
      %v1127 = vmul.f32 %v1113, %v1113
      %v1128 = vmul.f32 %v1114, %v1114
      %v1129 = vsel %vm245, %v1127, 0.0
      %v1130 = vsel %vm245, %v1128, 0.0
      %v1131 = vadd.f32 %v1129, %v1130
      %1132 = vadd.xlane.f32.xlu0 %v1131
      %v1133 = vpop.xlane.xlu0 %1132
      %vm1134 = vcmask 11272
      %1135 = vst.msk [vmem:[%s181] sm:$0xf] %vm1134, %v1133
      %p1136 = scmp.lt.s32.totalorder %s15, 1
      %s1137 = scalar_select %p1136, %s15, 1
      %s1138 = smul.addr %s1137, 2
      %s1139 = smul.addr %s1138, 4
      %s1140 = scalar_lea.vmem %s2, %s1139
      %p1141 = scmp.lt.s32.totalorder %s15, 1
      %s1142 = scalar_select %p1141, %s15, 1
      %s1143 = smul.addr %s1142, 4
      %s1144 = scalar_lea.vmem %s3, %s1143
      // Predicated region
      $region29: #{conv_block.2} parent=27 // pred_check
        %p1145 = pneg %p80
      $region30: #{conv_block.2} parent=27 // pred_check_branch
        %1147 = sbr.rel (%p1145) target = $region32
      $region31: #{conv_block.2} parent=27 // pred_region
        _
      $region32: #{conv_block.2} parent=27 // pred_fallthru
        _
      // Predicated region
      $region33: #{conv_block.2} parent=27 // pred_check
        %p1148 = pneg %p106
      $region34: #{conv_block.2} parent=27 // pred_check_branch
        %1150 = sbr.rel (%p1148) target = $region36
      $region35: #{conv_block.2} parent=27 // pred_region
        _
      $region36: #{conv_block.2} parent=27 // pred_fallthru
        _
    $region28: #{conv_block.2} parent=5 // pred_fallthru
      _
    %p1151 = scmp.le.s32.totalorder 2, %s10
    // Predicated region
    $region37: #{conv_block.2} parent=5 // pred_check
      %p1152 = pneg %p1151
    $region38: #{conv_block.2} parent=5 // pred_check_branch
      %1154 = sbr.rel (%p1152) target = $region40
    $region39: #{conv_block.2} parent=5 // pred_region
      %s1155 = ssub.s32 %s10, 2
      // Predicated region
      $region41: #{conv_block.2} parent=39 // pred_check
        %p1156 = pneg %p86
      $region42: #{conv_block.2} parent=39 // pred_check_branch
        %1158 = sbr.rel (%p1156) target = $region44
      $region43: #{conv_block.2} parent=39 // pred_region
        %p1159 = scmp.lt.s32.totalorder %s16, 1
        %s1160 = scalar_select %p1159, %s16, 1
        %s1161 = smul.addr %s1160, 2
        %s1162 = smul.addr %s1161, 4
        %s1163 = scalar_lea.vmem %s2, %s1162
      $region44: #{conv_block.2} parent=39 // pred_fallthru
        _
      // Predicated region
      $region45: #{conv_block.2} parent=39 // pred_check
        %p1164 = pneg %p112
      $region46: #{conv_block.2} parent=39 // pred_check_branch
        %1166 = sbr.rel (%p1164) target = $region48
      $region47: #{conv_block.2} parent=39 // pred_region
        %p1167 = scmp.lt.s32.totalorder %s16, 1
        %s1168 = scalar_select %p1167, %s16, 1
        %s1169 = smul.addr %s1168, 4
        %s1170 = scalar_lea.vmem %s3, %s1169
      $region48: #{conv_block.2} parent=39 // pred_fallthru
        _
    $region40: #{conv_block.2} parent=5 // pred_fallthru
      _
  $region6: #{conv_block.2} parent=0 // loop_footer
    %s14 = sadd.s32 1, %s10
  $region7: #{conv_block.2} parent=0 // loop_footer_branch
    %9 = sbr.rel target = $region3
  $region8: #{conv_block.2} parent=0 // loop_exit
    _

</llo_original>
